<compile_context>
chip_gen: v5e
topology: v5e:2x2
jax: 0.10.0
libtpu: 0.0.40
codegen_flags: <defaults>
</compile_context>

<pallas_src>
import functools

import jax
import jax.numpy as jnp
from jax.experimental import pallas as pl
from jax.experimental.pallas import tpu as pltpu

EMBED_DIM = 128
BLOCK_SIZE = 128
N_HEADS = 4
N_LAYERS = 6
HEAD_SIZE = EMBED_DIM // N_HEADS
VOCAB_SIZE = 65                 # stand-in for len(sorted(set(text)))
VOCAB_PAD = 128                 # lane-dense padded LM-head width
LN_EPS = 1e-5
NEG_BIG = -1e30                 # finite mask value (avoids -inf - -inf -> NaN)
SCALE = 1.0 / float(EMBED_DIM) ** 0.5   # reference scales by C**-0.5, C = embed_dim


def _layernorm(x, gamma, beta):
    # PyTorch nn.LayerNorm: biased variance, eps inside rsqrt.
    mu = jnp.mean(x, axis=-1, keepdims=True)
    var = jnp.mean(jnp.square(x - mu), axis=-1, keepdims=True)
    return (x - mu) * jax.lax.rsqrt(var + LN_EPS) * gamma + beta


# ----------------------------------------------------------------------------
# Fused Pallas kernel: 6 transformer blocks + final LN + LM head
# ----------------------------------------------------------------------------
def gpt_kernel(x_ref,
               ln1_g_ref, ln1_b_ref,
               wqkv_ref, wp_ref, bp_ref,
               ln2_g_ref, ln2_b_ref,
               w1_ref, b1_ref, w2_ref, b2_ref,
               lnf_g_ref, lnf_b_ref, lmw_ref, lmb_ref,
               o_ref,
               act_ref):
    layer = pl.program_id(1)
    n_layers = pl.num_programs(1)

    # Load the activation tile from HBM once; keep it resident across layers.
    @pl.when(layer == 0)
    def _():
        act_ref[...] = x_ref[0]

    x = act_ref[...]                               # (T, D) f32
    T = x.shape[0]
    D = EMBED_DIM

    # --- LayerNorm 1 ---
    xn = _layernorm(x, ln1_g_ref[0], ln1_b_ref[0]).astype(jnp.bfloat16)

    # --- multi-head causal self-attention ---
    # Fused QKV: one lane-dense (T,128)x(128,384) bf16 matmul, f32 acc.
    qkv = jnp.dot(xn, wqkv_ref[0], preferred_element_type=jnp.float32)  # (T, 3D)

    row = jax.lax.broadcasted_iota(jnp.int32, (T, T), 0)
    col = jax.lax.broadcasted_iota(jnp.int32, (T, T), 1)
    causal = col <= row

    wp = wp_ref[0]                                 # (D, D) bf16
    att = jnp.zeros((T, D), jnp.float32)
    for h in range(N_HEADS):                       # static unrolled loop
        lo = h * HEAD_SIZE
        hi = lo + HEAD_SIZE
        q_h = qkv[:, lo:hi].astype(jnp.bfloat16)             # (T, hs)
        k_h = qkv[:, D + lo:D + hi].astype(jnp.bfloat16)     # (T, hs)
        v_h = qkv[:, 2 * D + lo:2 * D + hi].astype(jnp.bfloat16)
        # q @ k.T without materializing a transpose.
        s = jax.lax.dot_general(q_h, k_h, (((1,), (1,)), ((), ())),
                                preferred_element_type=jnp.float32) * SCALE
        s = jnp.where(causal, s, NEG_BIG)
        s = s - jnp.max(s, axis=-1, keepdims=True)
        p = jnp.exp(s)
        p = p * pl.reciprocal(jnp.sum(p, axis=-1, keepdims=True), approx=True)
        # attention dropout -> identity at inference
        o_h = jnp.dot(p.astype(jnp.bfloat16), v_h,
                      preferred_element_type=jnp.float32)      # (T, hs)
        # Fold the output projection: row-block of wp -> lane-dense N=128
        # matmul; replaces torch.cat(head_outs) + full projection.
        att = att + jnp.dot(o_h.astype(jnp.bfloat16), wp[lo:hi, :],
                            preferred_element_type=jnp.float32)
    # projection bias; projection dropout -> identity at inference
    x = x + att + bp_ref[0]

    # --- LayerNorm 2 + FeedForward ---
    xn2 = _layernorm(x, ln2_g_ref[0], ln2_b_ref[0]).astype(jnp.bfloat16)
    h1 = jnp.dot(xn2, w1_ref[0], preferred_element_type=jnp.float32) + b1_ref[0]
    h1 = jnp.maximum(h1, 0.0).astype(jnp.bfloat16)
    h2 = jnp.dot(h1, w2_ref[0], preferred_element_type=jnp.float32) + b2_ref[0]
    # FFN dropout -> identity at inference
    x = x + h2
    act_ref[...] = x

    # --- final LayerNorm + LM head, fused into the last layer step ---
    @pl.when(layer == n_layers - 1)
    def _():
        xf = _layernorm(x, lnf_g_ref[...], lnf_b_ref[...]).astype(jnp.bfloat16)
        o_ref[0] = (jnp.dot(xf, lmw_ref[...], preferred_element_type=jnp.float32)
                    + lmb_ref[...])


# ----------------------------------------------------------------------------
# Wrapper around the single fused pallas_call
# ----------------------------------------------------------------------------
def gpt_blocks_and_head(x, p):
    B, T, D = x.shape
    vpad = p['lm_w'].shape[1]

    stacked = [p['ln1_g'], p['ln1_b'],
               p['wqkv'], p['wp'], p['bp'],
               p['ln2_g'], p['ln2_b'],
               p['w1'], p['b1'], p['w2'], p['b2']]
    finals = [p['lnf_g'], p['lnf_b'], p['lm_w'], p['lm_b']]

    def layer_spec(a):
        # Per-layer stacked weights: stream block `l` along the layer grid axis.
        zeros = (0,) * (a.ndim - 1)
        return pl.BlockSpec((1,) + a.shape[1:], lambda b, l, z=zeros: (l,) + z)

    def const_spec(a):
        # Layer-independent weights (final LN + padded LM head), fetched once.
        zeros = (0,) * a.ndim
        return pl.BlockSpec(a.shape, lambda b, l, z=zeros: z)

    logits = pl.pallas_call(
        gpt_kernel,
        out_shape=jax.ShapeDtypeStruct((B, T, vpad), jnp.float32),
        grid_spec=pltpu.PrefetchScalarGridSpec(
            num_scalar_prefetch=0,
            grid=(B, N_LAYERS),
            in_specs=[pl.BlockSpec((1, T, D), lambda b, l: (b, 0, 0))]
                     + [layer_spec(w) for w in stacked]
                     + [const_spec(w) for w in finals],
            out_specs=pl.BlockSpec((1, T, vpad), lambda b, l: (b, 0, 0)),
            scratch_shapes=[pltpu.VMEM((T, D), jnp.float32)],
        ),
        compiler_params=pltpu.CompilerParams(
            dimension_semantics=("parallel", "arbitrary")),
    )(x, *stacked, *finals)
    return logits


# ----------------------------------------------------------------------------
# Parameter construction (deterministic, synthetic, per-layer weights stacked)
# ----------------------------------------------------------------------------
def init_params(key):
    keys = iter(jax.random.split(key, 16))
    L, D, H4 = N_LAYERS, EMBED_DIM, 4 * EMBED_DIM

    def w(shape, dtype=jnp.bfloat16, scale=0.02):
        return (scale * jax.random.normal(next(keys), shape)).astype(dtype)

    lm_w = 0.02 * jax.random.normal(next(keys), (D, VOCAB_SIZE))
    lm_w = jnp.pad(lm_w, ((0, 0), (0, VOCAB_PAD - VOCAB_SIZE))).astype(jnp.bfloat16)

    return {
        'tok_emb': w((VOCAB_SIZE, D), jnp.float32),
        'pos_emb': w((BLOCK_SIZE, D), jnp.float32),
        # per-layer weights stacked along a leading layer dim
        'ln1_g': jnp.ones((L, 1, D), jnp.float32),
        'ln1_b': jnp.zeros((L, 1, D), jnp.float32),
        'wqkv': w((L, D, 3 * D)),                       # fused [Wq | Wk | Wv]
        'wp': w((L, D, D)),
        'bp': jnp.zeros((L, 1, D), jnp.float32),
        'ln2_g': jnp.ones((L, 1, D), jnp.float32),
        'ln2_b': jnp.zeros((L, 1, D), jnp.float32),
        'w1': w((L, D, H4)),
        'b1': jnp.zeros((L, 1, H4), jnp.float32),
        'w2': w((L, H4, D)),
        'b2': jnp.zeros((L, 1, D), jnp.float32),
        # final LayerNorm + lane-padded LM head
        'lnf_g': jnp.ones((1, D), jnp.float32),
        'lnf_b': jnp.zeros((1, D), jnp.float32),
        'lm_w': lm_w,                                   # (D, 128) bf16, cols>=65 zero
        'lm_b': jnp.zeros((1, VOCAB_PAD), jnp.float32),
    }


# ----------------------------------------------------------------------------
# Full GPT forward (targets=None path -> returns logits)
# ----------------------------------------------------------------------------
@functools.partial(jax.jit)
def gpt_forward(idx, params):
    B, T = idx.shape
    tok_emb = jnp.take(params['tok_emb'], idx, axis=0)        # (B, T, D)
    pos_emb = params['pos_emb'][:T]                           # (T, D)
    x = (tok_emb + pos_emb[None, :, :]).astype(jnp.float32)
    logits_pad = gpt_blocks_and_head(x, params)               # (B, T, 128)
    return logits_pad[:, :, :VOCAB_SIZE]                      # (B, T, 65)


if __name__ == "__main__":
    key = jax.random.PRNGKey(0)
    pkey, ikey = jax.random.split(key)
    params = init_params(pkey)

    B, T = 2, 8
    idx = jax.random.randint(ikey, (B, T), 0, VOCAB_SIZE, dtype=jnp.int32)

    logits = gpt_forward(idx, params)
    logits = jax.block_until_ready(logits)
    assert logits.shape == (B, T, VOCAB_SIZE), logits.shape
    assert bool(jnp.all(jnp.isfinite(logits)))
    print("KERNEL_OK")
</pallas_src>

<mosaic_0001>
module attributes {stable_mosaic.version = 11 : i64} {
  func.func @gpt_kernel(%arg0: i32, %arg1: i32, %arg2: memref<1x8x128xf32, #tpu.memory_space<vmem>>, %arg3: memref<1x1x128xf32, #tpu.memory_space<vmem>>, %arg4: memref<1x1x128xf32, #tpu.memory_space<vmem>>, %arg5: memref<1x128x384xbf16, #tpu.memory_space<vmem>>, %arg6: memref<1x128x128xbf16, #tpu.memory_space<vmem>>, %arg7: memref<1x1x128xf32, #tpu.memory_space<vmem>>, %arg8: memref<1x1x128xf32, #tpu.memory_space<vmem>>, %arg9: memref<1x1x128xf32, #tpu.memory_space<vmem>>, %arg10: memref<1x128x512xbf16, #tpu.memory_space<vmem>>, %arg11: memref<1x1x512xf32, #tpu.memory_space<vmem>>, %arg12: memref<1x512x128xbf16, #tpu.memory_space<vmem>>, %arg13: memref<1x1x128xf32, #tpu.memory_space<vmem>>, %arg14: memref<1x128xf32, #tpu.memory_space<vmem>>, %arg15: memref<1x128xf32, #tpu.memory_space<vmem>>, %arg16: memref<128x128xbf16, #tpu.memory_space<vmem>>, %arg17: memref<1x128xf32, #tpu.memory_space<vmem>>, %arg18: memref<1x8x128xf32, #tpu.memory_space<vmem>>, %arg19: memref<8x128xf32, #tpu.memory_space<vmem>>) attributes {dimension_semantics = [#tpu.dimension_semantics<parallel>, #tpu.dimension_semantics<arbitrary>], iteration_bounds = array<i64: 2, 6>, scalar_prefetch = 0 : i64, scratch_operands = 1 : i64, tpu.core_type = #tpu.core_type<tc>, window_params = [{transform_indices = @transform_0, window_bounds = array<i64: 1, 8, 128>}, {transform_indices = @transform_1, window_bounds = array<i64: 1, 1, 128>}, {transform_indices = @transform_2, window_bounds = array<i64: 1, 1, 128>}, {transform_indices = @transform_3, window_bounds = array<i64: 1, 128, 384>}, {transform_indices = @transform_4, window_bounds = array<i64: 1, 128, 128>}, {transform_indices = @transform_5, window_bounds = array<i64: 1, 1, 128>}, {transform_indices = @transform_6, window_bounds = array<i64: 1, 1, 128>}, {transform_indices = @transform_7, window_bounds = array<i64: 1, 1, 128>}, {transform_indices = @transform_8, window_bounds = array<i64: 1, 128, 512>}, {transform_indices = @transform_9, window_bounds = array<i64: 1, 1, 512>}, {transform_indices = @transform_10, window_bounds = array<i64: 1, 512, 128>}, {transform_indices = @transform_11, window_bounds = array<i64: 1, 1, 128>}, {pipeline_mode = #tpu.pipeline_mode<synchronous>, transform_indices = @transform_12, window_bounds = array<i64: 1, 128>}, {pipeline_mode = #tpu.pipeline_mode<synchronous>, transform_indices = @transform_13, window_bounds = array<i64: 1, 128>}, {pipeline_mode = #tpu.pipeline_mode<synchronous>, transform_indices = @transform_14, window_bounds = array<i64: 128, 128>}, {pipeline_mode = #tpu.pipeline_mode<synchronous>, transform_indices = @transform_15, window_bounds = array<i64: 1, 128>}, {transform_indices = @transform_16, window_bounds = array<i64: 1, 8, 128>}]} {
    %c0_i32 = arith.constant 0 : i32
    %0 = arith.cmpi eq, %arg1, %c0_i32 : i32
    %1 = arith.extui %0 : i1 to i32
    %c0_i32_0 = arith.constant 0 : i32
    %2 = arith.cmpi ne, %1, %c0_i32_0 : i32
    scf.if %2 {
      %c0_80 = arith.constant 0 : index
      %c0_81 = arith.constant 0 : index
      %c0_82 = arith.constant 0 : index
      %202 = vector.load %arg2[%c0_80, %c0_81, %c0_82] : memref<1x8x128xf32, #tpu.memory_space<vmem>>, vector<1x8x128xf32>
      %203 = vector.shape_cast %202 : vector<1x8x128xf32> to vector<8x128xf32>
      %c0_83 = arith.constant 0 : index
      %c0_84 = arith.constant 0 : index
      %204 = vector.load %arg19[%c0_83, %c0_84] : memref<8x128xf32, #tpu.memory_space<vmem>>, vector<8x128xf32>
      tpu.vector_store %arg19[%c0_83, %c0_84], %203 {strides = array<i32>} : memref<8x128xf32, #tpu.memory_space<vmem>>, vector<8x128xf32>,
    } else {
    }
    %c0 = arith.constant 0 : index
    %c0_1 = arith.constant 0 : index
    %3 = vector.load %arg19[%c0, %c0_1] : memref<8x128xf32, #tpu.memory_space<vmem>>, vector<8x128xf32>
    %c0_2 = arith.constant 0 : index
    %c0_3 = arith.constant 0 : index
    %c0_4 = arith.constant 0 : index
    %4 = vector.load %arg3[%c0_2, %c0_3, %c0_4] : memref<1x1x128xf32, #tpu.memory_space<vmem>>, vector<1x1x128xf32>
    %5 = vector.shape_cast %4 : vector<1x1x128xf32> to vector<1x128xf32>
    %c0_5 = arith.constant 0 : index
    %c0_6 = arith.constant 0 : index
    %c0_7 = arith.constant 0 : index
    %6 = vector.load %arg4[%c0_5, %c0_6, %c0_7] : memref<1x1x128xf32, #tpu.memory_space<vmem>>, vector<1x1x128xf32>
    %7 = vector.shape_cast %6 : vector<1x1x128xf32> to vector<1x128xf32>
    %cst = arith.constant dense<0.000000e+00> : vector<8xf32>
    %8 = vector.multi_reduction <add>, %3, %cst [1] : vector<8x128xf32> to vector<8xf32>
    %9 = vector.shape_cast %8 : vector<8xf32> to vector<8x1xf32>
    %cst_8 = arith.constant 1.280000e+02 : f32
    %10 = vector.broadcast %cst_8 : f32 to vector<8x1xf32>
    %11 = arith.divf %9, %10 : vector<8x1xf32>
    %12 = vector.broadcast %11 : vector<8x1xf32> to vector<8x128xf32>
    %13 = arith.subf %3, %12 : vector<8x128xf32>
    %14 = arith.mulf %13, %13 : vector<8x128xf32>
    %cst_9 = arith.constant dense<0.000000e+00> : vector<8xf32>
    %15 = vector.multi_reduction <add>, %14, %cst_9 [1] : vector<8x128xf32> to vector<8xf32>
    %16 = vector.shape_cast %15 : vector<8xf32> to vector<8x1xf32>
    %cst_10 = arith.constant 1.280000e+02 : f32
    %17 = vector.broadcast %cst_10 : f32 to vector<8x1xf32>
    %18 = arith.divf %16, %17 : vector<8x1xf32>
    %19 = vector.broadcast %11 : vector<8x1xf32> to vector<8x128xf32>
    %20 = arith.subf %3, %19 : vector<8x128xf32>
    %cst_11 = arith.constant 9.99999974E-6 : f32
    %21 = vector.broadcast %cst_11 : f32 to vector<8x1xf32>
    %22 = arith.addf %18, %21 : vector<8x1xf32>
    %23 = math.rsqrt %22 : vector<8x1xf32>
    %24 = vector.broadcast %23 : vector<8x1xf32> to vector<8x128xf32>
    %25 = arith.mulf %20, %24 : vector<8x128xf32>
    %26 = vector.broadcast %5 : vector<1x128xf32> to vector<8x128xf32>
    %27 = arith.mulf %25, %26 : vector<8x128xf32>
    %28 = vector.broadcast %7 : vector<1x128xf32> to vector<8x128xf32>
    %29 = arith.addf %27, %28 : vector<8x128xf32>
    %30 = arith.truncf %29 : vector<8x128xf32> to vector<8x128xbf16>
    %c0_12 = arith.constant 0 : index
    %c0_13 = arith.constant 0 : index
    %c0_14 = arith.constant 0 : index
    %31 = vector.load %arg5[%c0_12, %c0_13, %c0_14] : memref<1x128x384xbf16, #tpu.memory_space<vmem>>, vector<1x128x384xbf16>
    %32 = vector.shape_cast %31 : vector<1x128x384xbf16> to vector<128x384xbf16>
    %cst_15 = arith.constant dense<0.000000e+00> : vector<8x384xf32>
    %33 = tpu.matmul %30, %32, %cst_15 {dimension_numbers = #tpu.dot_dimension_numbers<[1], [0], [0], [1], [0, 0, 1, 1], [], []>} : vector<8x128xbf16>, vector<128x384xbf16>, vector<8x384xf32> -> vector<8x384xf32>
    %34 = tpu.iota {dimensions = array<i32: 0>} : vector<8x8xi32>
    %35 = tpu.iota {dimensions = array<i32: 1>} : vector<8x8xi32>
    %36 = arith.cmpi sle, %35, %34 : vector<8x8xi32>
    %c0_16 = arith.constant 0 : index
    %c0_17 = arith.constant 0 : index
    %c0_18 = arith.constant 0 : index
    %37 = vector.load %arg6[%c0_16, %c0_17, %c0_18] : memref<1x128x128xbf16, #tpu.memory_space<vmem>>, vector<1x128x128xbf16>
    %38 = vector.shape_cast %37 : vector<1x128x128xbf16> to vector<128x128xbf16>
    %cst_19 = arith.constant 0.000000e+00 : f32
    %39 = vector.broadcast %cst_19 : f32 to vector<8x128xf32>
    %40 = vector.extract_strided_slice %33 {offsets = [0, 0], sizes = [8, 32], strides = [1, 1]} : vector<8x384xf32> to vector<8x32xf32>
    %41 = arith.truncf %40 : vector<8x32xf32> to vector<8x32xbf16>
    %42 = vector.extract_strided_slice %33 {offsets = [0, 128], sizes = [8, 32], strides = [1, 1]} : vector<8x384xf32> to vector<8x32xf32>
    %43 = arith.truncf %42 : vector<8x32xf32> to vector<8x32xbf16>
    %44 = vector.extract_strided_slice %33 {offsets = [0, 256], sizes = [8, 32], strides = [1, 1]} : vector<8x384xf32> to vector<8x32xf32>
    %45 = arith.truncf %44 : vector<8x32xf32> to vector<8x32xbf16>
    %cst_20 = arith.constant dense<0.000000e+00> : vector<8x8xf32>
    %46 = tpu.matmul %41, %43, %cst_20 {dimension_numbers = #tpu.dot_dimension_numbers<[1], [1], [0], [0], [0, 0, 1, 0], [], []>} : vector<8x32xbf16>, vector<8x32xbf16>, vector<8x8xf32> -> vector<8x8xf32>
    %cst_21 = arith.constant 0.0883883461 : f32
    %47 = vector.broadcast %cst_21 : f32 to vector<8x8xf32>
    %48 = arith.mulf %46, %47 : vector<8x8xf32>
    %cst_22 = arith.constant -1.000000e+30 : f32
    %49 = vector.broadcast %cst_22 : f32 to vector<8x8xf32>
    %50 = arith.select %36, %48, %49 : vector<8x8xi1>, vector<8x8xf32>
    %cst_23 = arith.constant dense<0xFF800000> : vector<8xf32>
    %51 = vector.multi_reduction <maximumf>, %50, %cst_23 [1] : vector<8x8xf32> to vector<8xf32>
    %52 = vector.shape_cast %51 : vector<8xf32> to vector<8x1xf32>
    %53 = vector.broadcast %52 : vector<8x1xf32> to vector<8x8xf32>
    %54 = arith.subf %50, %53 : vector<8x8xf32>
    %55 = math.exp %54 : vector<8x8xf32>
    %cst_24 = arith.constant dense<0.000000e+00> : vector<8xf32>
    %56 = vector.multi_reduction <add>, %55, %cst_24 [1] : vector<8x8xf32> to vector<8xf32>
    %57 = vector.shape_cast %56 : vector<8xf32> to vector<8x1xf32>
    %58 = tpu.reciprocal %57 {approx = true} : vector<8x1xf32> -> vector<8x1xf32>
    %59 = vector.broadcast %58 : vector<8x1xf32> to vector<8x8xf32>
    %60 = arith.mulf %55, %59 : vector<8x8xf32>
    %61 = arith.truncf %60 : vector<8x8xf32> to vector<8x8xbf16>
    %cst_25 = arith.constant dense<0.000000e+00> : vector<8x32xf32>
    %62 = tpu.matmul %61, %45, %cst_25 {dimension_numbers = #tpu.dot_dimension_numbers<[1], [0], [0], [1], [0, 0, 1, 1], [], []>} : vector<8x8xbf16>, vector<8x32xbf16>, vector<8x32xf32> -> vector<8x32xf32>
    %63 = arith.truncf %62 : vector<8x32xf32> to vector<8x32xbf16>
    %64 = vector.extract_strided_slice %38 {offsets = [0, 0], sizes = [32, 128], strides = [1, 1]} : vector<128x128xbf16> to vector<32x128xbf16>
    %cst_26 = arith.constant dense<0.000000e+00> : vector<8x128xf32>
    %65 = tpu.matmul %63, %64, %cst_26 {dimension_numbers = #tpu.dot_dimension_numbers<[1], [0], [0], [1], [0, 0, 1, 1], [], []>} : vector<8x32xbf16>, vector<32x128xbf16>, vector<8x128xf32> -> vector<8x128xf32>
    %66 = arith.addf %39, %65 : vector<8x128xf32>
    %67 = vector.extract_strided_slice %33 {offsets = [0, 32], sizes = [8, 32], strides = [1, 1]} : vector<8x384xf32> to vector<8x32xf32>
    %68 = arith.truncf %67 : vector<8x32xf32> to vector<8x32xbf16>
    %69 = vector.extract_strided_slice %33 {offsets = [0, 160], sizes = [8, 32], strides = [1, 1]} : vector<8x384xf32> to vector<8x32xf32>
    %70 = arith.truncf %69 : vector<8x32xf32> to vector<8x32xbf16>
    %71 = vector.extract_strided_slice %33 {offsets = [0, 288], sizes = [8, 32], strides = [1, 1]} : vector<8x384xf32> to vector<8x32xf32>
    %72 = arith.truncf %71 : vector<8x32xf32> to vector<8x32xbf16>
    %cst_27 = arith.constant dense<0.000000e+00> : vector<8x8xf32>
    %73 = tpu.matmul %68, %70, %cst_27 {dimension_numbers = #tpu.dot_dimension_numbers<[1], [1], [0], [0], [0, 0, 1, 0], [], []>} : vector<8x32xbf16>, vector<8x32xbf16>, vector<8x8xf32> -> vector<8x8xf32>
    %cst_28 = arith.constant 0.0883883461 : f32
    %74 = vector.broadcast %cst_28 : f32 to vector<8x8xf32>
    %75 = arith.mulf %73, %74 : vector<8x8xf32>
    %cst_29 = arith.constant -1.000000e+30 : f32
    %76 = vector.broadcast %cst_29 : f32 to vector<8x8xf32>
    %77 = arith.select %36, %75, %76 : vector<8x8xi1>, vector<8x8xf32>
    %cst_30 = arith.constant dense<0xFF800000> : vector<8xf32>
    %78 = vector.multi_reduction <maximumf>, %77, %cst_30 [1] : vector<8x8xf32> to vector<8xf32>
    %79 = vector.shape_cast %78 : vector<8xf32> to vector<8x1xf32>
    %80 = vector.broadcast %79 : vector<8x1xf32> to vector<8x8xf32>
    %81 = arith.subf %77, %80 : vector<8x8xf32>
    %82 = math.exp %81 : vector<8x8xf32>
    %cst_31 = arith.constant dense<0.000000e+00> : vector<8xf32>
    %83 = vector.multi_reduction <add>, %82, %cst_31 [1] : vector<8x8xf32> to vector<8xf32>
    %84 = vector.shape_cast %83 : vector<8xf32> to vector<8x1xf32>
    %85 = tpu.reciprocal %84 {approx = true} : vector<8x1xf32> -> vector<8x1xf32>
    %86 = vector.broadcast %85 : vector<8x1xf32> to vector<8x8xf32>
    %87 = arith.mulf %82, %86 : vector<8x8xf32>
    %88 = arith.truncf %87 : vector<8x8xf32> to vector<8x8xbf16>
    %cst_32 = arith.constant dense<0.000000e+00> : vector<8x32xf32>
    %89 = tpu.matmul %88, %72, %cst_32 {dimension_numbers = #tpu.dot_dimension_numbers<[1], [0], [0], [1], [0, 0, 1, 1], [], []>} : vector<8x8xbf16>, vector<8x32xbf16>, vector<8x32xf32> -> vector<8x32xf32>
    %90 = arith.truncf %89 : vector<8x32xf32> to vector<8x32xbf16>
    %91 = vector.extract_strided_slice %38 {offsets = [32, 0], sizes = [32, 128], strides = [1, 1]} : vector<128x128xbf16> to vector<32x128xbf16>
    %cst_33 = arith.constant dense<0.000000e+00> : vector<8x128xf32>
    %92 = tpu.matmul %90, %91, %cst_33 {dimension_numbers = #tpu.dot_dimension_numbers<[1], [0], [0], [1], [0, 0, 1, 1], [], []>} : vector<8x32xbf16>, vector<32x128xbf16>, vector<8x128xf32> -> vector<8x128xf32>
    %93 = arith.addf %66, %92 : vector<8x128xf32>
    %94 = vector.extract_strided_slice %33 {offsets = [0, 64], sizes = [8, 32], strides = [1, 1]} : vector<8x384xf32> to vector<8x32xf32>
    %95 = arith.truncf %94 : vector<8x32xf32> to vector<8x32xbf16>
    %96 = vector.extract_strided_slice %33 {offsets = [0, 192], sizes = [8, 32], strides = [1, 1]} : vector<8x384xf32> to vector<8x32xf32>
    %97 = arith.truncf %96 : vector<8x32xf32> to vector<8x32xbf16>
    %98 = vector.extract_strided_slice %33 {offsets = [0, 320], sizes = [8, 32], strides = [1, 1]} : vector<8x384xf32> to vector<8x32xf32>
    %99 = arith.truncf %98 : vector<8x32xf32> to vector<8x32xbf16>
    %cst_34 = arith.constant dense<0.000000e+00> : vector<8x8xf32>
    %100 = tpu.matmul %95, %97, %cst_34 {dimension_numbers = #tpu.dot_dimension_numbers<[1], [1], [0], [0], [0, 0, 1, 0], [], []>} : vector<8x32xbf16>, vector<8x32xbf16>, vector<8x8xf32> -> vector<8x8xf32>
    %cst_35 = arith.constant 0.0883883461 : f32
    %101 = vector.broadcast %cst_35 : f32 to vector<8x8xf32>
    %102 = arith.mulf %100, %101 : vector<8x8xf32>
    %cst_36 = arith.constant -1.000000e+30 : f32
    %103 = vector.broadcast %cst_36 : f32 to vector<8x8xf32>
    %104 = arith.select %36, %102, %103 : vector<8x8xi1>, vector<8x8xf32>
    %cst_37 = arith.constant dense<0xFF800000> : vector<8xf32>
    %105 = vector.multi_reduction <maximumf>, %104, %cst_37 [1] : vector<8x8xf32> to vector<8xf32>
    %106 = vector.shape_cast %105 : vector<8xf32> to vector<8x1xf32>
    %107 = vector.broadcast %106 : vector<8x1xf32> to vector<8x8xf32>
    %108 = arith.subf %104, %107 : vector<8x8xf32>
    %109 = math.exp %108 : vector<8x8xf32>
    %cst_38 = arith.constant dense<0.000000e+00> : vector<8xf32>
    %110 = vector.multi_reduction <add>, %109, %cst_38 [1] : vector<8x8xf32> to vector<8xf32>
    %111 = vector.shape_cast %110 : vector<8xf32> to vector<8x1xf32>
    %112 = tpu.reciprocal %111 {approx = true} : vector<8x1xf32> -> vector<8x1xf32>
    %113 = vector.broadcast %112 : vector<8x1xf32> to vector<8x8xf32>
    %114 = arith.mulf %109, %113 : vector<8x8xf32>
    %115 = arith.truncf %114 : vector<8x8xf32> to vector<8x8xbf16>
    %cst_39 = arith.constant dense<0.000000e+00> : vector<8x32xf32>
    %116 = tpu.matmul %115, %99, %cst_39 {dimension_numbers = #tpu.dot_dimension_numbers<[1], [0], [0], [1], [0, 0, 1, 1], [], []>} : vector<8x8xbf16>, vector<8x32xbf16>, vector<8x32xf32> -> vector<8x32xf32>
    %117 = arith.truncf %116 : vector<8x32xf32> to vector<8x32xbf16>
    %118 = vector.extract_strided_slice %38 {offsets = [64, 0], sizes = [32, 128], strides = [1, 1]} : vector<128x128xbf16> to vector<32x128xbf16>
    %cst_40 = arith.constant dense<0.000000e+00> : vector<8x128xf32>
    %119 = tpu.matmul %117, %118, %cst_40 {dimension_numbers = #tpu.dot_dimension_numbers<[1], [0], [0], [1], [0, 0, 1, 1], [], []>} : vector<8x32xbf16>, vector<32x128xbf16>, vector<8x128xf32> -> vector<8x128xf32>
    %120 = arith.addf %93, %119 : vector<8x128xf32>
    %121 = vector.extract_strided_slice %33 {offsets = [0, 96], sizes = [8, 32], strides = [1, 1]} : vector<8x384xf32> to vector<8x32xf32>
    %122 = arith.truncf %121 : vector<8x32xf32> to vector<8x32xbf16>
    %123 = vector.extract_strided_slice %33 {offsets = [0, 224], sizes = [8, 32], strides = [1, 1]} : vector<8x384xf32> to vector<8x32xf32>
    %124 = arith.truncf %123 : vector<8x32xf32> to vector<8x32xbf16>
    %125 = vector.extract_strided_slice %33 {offsets = [0, 352], sizes = [8, 32], strides = [1, 1]} : vector<8x384xf32> to vector<8x32xf32>
    %126 = arith.truncf %125 : vector<8x32xf32> to vector<8x32xbf16>
    %cst_41 = arith.constant dense<0.000000e+00> : vector<8x8xf32>
    %127 = tpu.matmul %122, %124, %cst_41 {dimension_numbers = #tpu.dot_dimension_numbers<[1], [1], [0], [0], [0, 0, 1, 0], [], []>} : vector<8x32xbf16>, vector<8x32xbf16>, vector<8x8xf32> -> vector<8x8xf32>
    %cst_42 = arith.constant 0.0883883461 : f32
    %128 = vector.broadcast %cst_42 : f32 to vector<8x8xf32>
    %129 = arith.mulf %127, %128 : vector<8x8xf32>
    %cst_43 = arith.constant -1.000000e+30 : f32
    %130 = vector.broadcast %cst_43 : f32 to vector<8x8xf32>
    %131 = arith.select %36, %129, %130 : vector<8x8xi1>, vector<8x8xf32>
    %cst_44 = arith.constant dense<0xFF800000> : vector<8xf32>
    %132 = vector.multi_reduction <maximumf>, %131, %cst_44 [1] : vector<8x8xf32> to vector<8xf32>
    %133 = vector.shape_cast %132 : vector<8xf32> to vector<8x1xf32>
    %134 = vector.broadcast %133 : vector<8x1xf32> to vector<8x8xf32>
    %135 = arith.subf %131, %134 : vector<8x8xf32>
    %136 = math.exp %135 : vector<8x8xf32>
    %cst_45 = arith.constant dense<0.000000e+00> : vector<8xf32>
    %137 = vector.multi_reduction <add>, %136, %cst_45 [1] : vector<8x8xf32> to vector<8xf32>
    %138 = vector.shape_cast %137 : vector<8xf32> to vector<8x1xf32>
    %139 = tpu.reciprocal %138 {approx = true} : vector<8x1xf32> -> vector<8x1xf32>
    %140 = vector.broadcast %139 : vector<8x1xf32> to vector<8x8xf32>
    %141 = arith.mulf %136, %140 : vector<8x8xf32>
    %142 = arith.truncf %141 : vector<8x8xf32> to vector<8x8xbf16>
    %cst_46 = arith.constant dense<0.000000e+00> : vector<8x32xf32>
    %143 = tpu.matmul %142, %126, %cst_46 {dimension_numbers = #tpu.dot_dimension_numbers<[1], [0], [0], [1], [0, 0, 1, 1], [], []>} : vector<8x8xbf16>, vector<8x32xbf16>, vector<8x32xf32> -> vector<8x32xf32>
    %144 = arith.truncf %143 : vector<8x32xf32> to vector<8x32xbf16>
    %145 = vector.extract_strided_slice %38 {offsets = [96, 0], sizes = [32, 128], strides = [1, 1]} : vector<128x128xbf16> to vector<32x128xbf16>
    %cst_47 = arith.constant dense<0.000000e+00> : vector<8x128xf32>
    %146 = tpu.matmul %144, %145, %cst_47 {dimension_numbers = #tpu.dot_dimension_numbers<[1], [0], [0], [1], [0, 0, 1, 1], [], []>} : vector<8x32xbf16>, vector<32x128xbf16>, vector<8x128xf32> -> vector<8x128xf32>
    %147 = arith.addf %120, %146 : vector<8x128xf32>
    %148 = arith.addf %3, %147 : vector<8x128xf32>
    %c0_48 = arith.constant 0 : index
    %c0_49 = arith.constant 0 : index
    %c0_50 = arith.constant 0 : index
    %149 = vector.load %arg7[%c0_48, %c0_49, %c0_50] : memref<1x1x128xf32, #tpu.memory_space<vmem>>, vector<1x1x128xf32>
    %150 = vector.shape_cast %149 : vector<1x1x128xf32> to vector<1x128xf32>
    %151 = vector.broadcast %150 : vector<1x128xf32> to vector<8x128xf32>
    %152 = arith.addf %148, %151 : vector<8x128xf32>
    %c0_51 = arith.constant 0 : index
    %c0_52 = arith.constant 0 : index
    %c0_53 = arith.constant 0 : index
    %153 = vector.load %arg8[%c0_51, %c0_52, %c0_53] : memref<1x1x128xf32, #tpu.memory_space<vmem>>, vector<1x1x128xf32>
    %154 = vector.shape_cast %153 : vector<1x1x128xf32> to vector<1x128xf32>
    %c0_54 = arith.constant 0 : index
    %c0_55 = arith.constant 0 : index
    %c0_56 = arith.constant 0 : index
    %155 = vector.load %arg9[%c0_54, %c0_55, %c0_56] : memref<1x1x128xf32, #tpu.memory_space<vmem>>, vector<1x1x128xf32>
    %156 = vector.shape_cast %155 : vector<1x1x128xf32> to vector<1x128xf32>
    %cst_57 = arith.constant dense<0.000000e+00> : vector<8xf32>
    %157 = vector.multi_reduction <add>, %152, %cst_57 [1] : vector<8x128xf32> to vector<8xf32>
    %158 = vector.shape_cast %157 : vector<8xf32> to vector<8x1xf32>
    %cst_58 = arith.constant 1.280000e+02 : f32
    %159 = vector.broadcast %cst_58 : f32 to vector<8x1xf32>
    %160 = arith.divf %158, %159 : vector<8x1xf32>
    %161 = vector.broadcast %160 : vector<8x1xf32> to vector<8x128xf32>
    %162 = arith.subf %152, %161 : vector<8x128xf32>
    %163 = arith.mulf %162, %162 : vector<8x128xf32>
    %cst_59 = arith.constant dense<0.000000e+00> : vector<8xf32>
    %164 = vector.multi_reduction <add>, %163, %cst_59 [1] : vector<8x128xf32> to vector<8xf32>
    %165 = vector.shape_cast %164 : vector<8xf32> to vector<8x1xf32>
    %cst_60 = arith.constant 1.280000e+02 : f32
    %166 = vector.broadcast %cst_60 : f32 to vector<8x1xf32>
    %167 = arith.divf %165, %166 : vector<8x1xf32>
    %168 = vector.broadcast %160 : vector<8x1xf32> to vector<8x128xf32>
    %169 = arith.subf %152, %168 : vector<8x128xf32>
    %cst_61 = arith.constant 9.99999974E-6 : f32
    %170 = vector.broadcast %cst_61 : f32 to vector<8x1xf32>
    %171 = arith.addf %167, %170 : vector<8x1xf32>
    %172 = math.rsqrt %171 : vector<8x1xf32>
    %173 = vector.broadcast %172 : vector<8x1xf32> to vector<8x128xf32>
    %174 = arith.mulf %169, %173 : vector<8x128xf32>
    %175 = vector.broadcast %154 : vector<1x128xf32> to vector<8x128xf32>
    %176 = arith.mulf %174, %175 : vector<8x128xf32>
    %177 = vector.broadcast %156 : vector<1x128xf32> to vector<8x128xf32>
    %178 = arith.addf %176, %177 : vector<8x128xf32>
    %179 = arith.truncf %178 : vector<8x128xf32> to vector<8x128xbf16>
    %c0_62 = arith.constant 0 : index
    %c0_63 = arith.constant 0 : index
    %c0_64 = arith.constant 0 : index
    %180 = vector.load %arg10[%c0_62, %c0_63, %c0_64] : memref<1x128x512xbf16, #tpu.memory_space<vmem>>, vector<1x128x512xbf16>
    %181 = vector.shape_cast %180 : vector<1x128x512xbf16> to vector<128x512xbf16>
    %cst_65 = arith.constant dense<0.000000e+00> : vector<8x512xf32>
    %182 = tpu.matmul %179, %181, %cst_65 {dimension_numbers = #tpu.dot_dimension_numbers<[1], [0], [0], [1], [0, 0, 1, 1], [], []>} : vector<8x128xbf16>, vector<128x512xbf16>, vector<8x512xf32> -> vector<8x512xf32>
    %c0_66 = arith.constant 0 : index
    %c0_67 = arith.constant 0 : index
    %c0_68 = arith.constant 0 : index
    %183 = vector.load %arg11[%c0_66, %c0_67, %c0_68] : memref<1x1x512xf32, #tpu.memory_space<vmem>>, vector<1x1x512xf32>
    %184 = vector.shape_cast %183 : vector<1x1x512xf32> to vector<1x512xf32>
    %185 = vector.broadcast %184 : vector<1x512xf32> to vector<8x512xf32>
    %186 = arith.addf %182, %185 : vector<8x512xf32>
    %cst_69 = arith.constant 0.000000e+00 : f32
    %187 = vector.broadcast %cst_69 : f32 to vector<8x512xf32>
    %188 = arith.maximumf %186, %187 : vector<8x512xf32>
    %189 = arith.truncf %188 : vector<8x512xf32> to vector<8x512xbf16>
    %c0_70 = arith.constant 0 : index
    %c0_71 = arith.constant 0 : index
    %c0_72 = arith.constant 0 : index
    %190 = vector.load %arg12[%c0_70, %c0_71, %c0_72] : memref<1x512x128xbf16, #tpu.memory_space<vmem>>, vector<1x512x128xbf16>
    %191 = vector.shape_cast %190 : vector<1x512x128xbf16> to vector<512x128xbf16>
    %cst_73 = arith.constant dense<0.000000e+00> : vector<8x128xf32>
    %192 = tpu.matmul %189, %191, %cst_73 {dimension_numbers = #tpu.dot_dimension_numbers<[1], [0], [0], [1], [0, 0, 1, 1], [], []>} : vector<8x512xbf16>, vector<512x128xbf16>, vector<8x128xf32> -> vector<8x128xf32>
    %c0_74 = arith.constant 0 : index
    %c0_75 = arith.constant 0 : index
    %c0_76 = arith.constant 0 : index
    %193 = vector.load %arg13[%c0_74, %c0_75, %c0_76] : memref<1x1x128xf32, #tpu.memory_space<vmem>>, vector<1x1x128xf32>
    %194 = vector.shape_cast %193 : vector<1x1x128xf32> to vector<1x128xf32>
    %195 = vector.broadcast %194 : vector<1x128xf32> to vector<8x128xf32>
    %196 = arith.addf %192, %195 : vector<8x128xf32>
    %197 = arith.addf %152, %196 : vector<8x128xf32>
    %c0_77 = arith.constant 0 : index
    %c0_78 = arith.constant 0 : index
    %198 = vector.load %arg19[%c0_77, %c0_78] : memref<8x128xf32, #tpu.memory_space<vmem>>, vector<8x128xf32>
    tpu.vector_store %arg19[%c0_77, %c0_78], %197 {strides = array<i32>} : memref<8x128xf32, #tpu.memory_space<vmem>>, vector<8x128xf32>,
    %c5_i32 = arith.constant 5 : i32
    %199 = arith.cmpi eq, %arg1, %c5_i32 : i32
    %200 = arith.extui %199 : i1 to i32
    %c0_i32_79 = arith.constant 0 : i32
    %201 = arith.cmpi ne, %200, %c0_i32_79 : i32
    scf.if %201 {
      %c0_80 = arith.constant 0 : index
      %c0_81 = arith.constant 0 : index
      %202 = vector.load %arg14[%c0_80, %c0_81] : memref<1x128xf32, #tpu.memory_space<vmem>>, vector<1x128xf32>
      %c0_82 = arith.constant 0 : index
      %c0_83 = arith.constant 0 : index
      %203 = vector.load %arg15[%c0_82, %c0_83] : memref<1x128xf32, #tpu.memory_space<vmem>>, vector<1x128xf32>
      %cst_84 = arith.constant dense<0.000000e+00> : vector<8xf32>
      %204 = vector.multi_reduction <add>, %197, %cst_84 [1] : vector<8x128xf32> to vector<8xf32>
      %205 = vector.shape_cast %204 : vector<8xf32> to vector<8x1xf32>
      %cst_85 = arith.constant 1.280000e+02 : f32
      %206 = vector.broadcast %cst_85 : f32 to vector<8x1xf32>
      %207 = arith.divf %205, %206 : vector<8x1xf32>
      %208 = vector.broadcast %207 : vector<8x1xf32> to vector<8x128xf32>
      %209 = arith.subf %197, %208 : vector<8x128xf32>
      %210 = arith.mulf %209, %209 : vector<8x128xf32>
      %cst_86 = arith.constant dense<0.000000e+00> : vector<8xf32>
      %211 = vector.multi_reduction <add>, %210, %cst_86 [1] : vector<8x128xf32> to vector<8xf32>
      %212 = vector.shape_cast %211 : vector<8xf32> to vector<8x1xf32>
      %cst_87 = arith.constant 1.280000e+02 : f32
      %213 = vector.broadcast %cst_87 : f32 to vector<8x1xf32>
      %214 = arith.divf %212, %213 : vector<8x1xf32>
      %215 = vector.broadcast %207 : vector<8x1xf32> to vector<8x128xf32>
      %216 = arith.subf %197, %215 : vector<8x128xf32>
      %cst_88 = arith.constant 9.99999974E-6 : f32
      %217 = vector.broadcast %cst_88 : f32 to vector<8x1xf32>
      %218 = arith.addf %214, %217 : vector<8x1xf32>
      %219 = math.rsqrt %218 : vector<8x1xf32>
      %220 = vector.broadcast %219 : vector<8x1xf32> to vector<8x128xf32>
      %221 = arith.mulf %216, %220 : vector<8x128xf32>
      %222 = vector.broadcast %202 : vector<1x128xf32> to vector<8x128xf32>
      %223 = arith.mulf %221, %222 : vector<8x128xf32>
      %224 = vector.broadcast %203 : vector<1x128xf32> to vector<8x128xf32>
      %225 = arith.addf %223, %224 : vector<8x128xf32>
      %226 = arith.truncf %225 : vector<8x128xf32> to vector<8x128xbf16>
      %c0_89 = arith.constant 0 : index
      %c0_90 = arith.constant 0 : index
      %227 = vector.load %arg16[%c0_89, %c0_90] : memref<128x128xbf16, #tpu.memory_space<vmem>>, vector<128x128xbf16>
      %cst_91 = arith.constant dense<0.000000e+00> : vector<8x128xf32>
      %228 = tpu.matmul %226, %227, %cst_91 {dimension_numbers = #tpu.dot_dimension_numbers<[1], [0], [0], [1], [0, 0, 1, 1], [], []>} : vector<8x128xbf16>, vector<128x128xbf16>, vector<8x128xf32> -> vector<8x128xf32>
      %c0_92 = arith.constant 0 : index
      %c0_93 = arith.constant 0 : index
      %229 = vector.load %arg17[%c0_92, %c0_93] : memref<1x128xf32, #tpu.memory_space<vmem>>, vector<1x128xf32>
      %230 = vector.broadcast %229 : vector<1x128xf32> to vector<8x128xf32>
      %231 = arith.addf %228, %230 : vector<8x128xf32>
      %c0_94 = arith.constant 0 : index
      %c0_95 = arith.constant 0 : index
      %c0_96 = arith.constant 0 : index
      %232 = vector.load %arg18[%c0_94, %c0_95, %c0_96] : memref<1x8x128xf32, #tpu.memory_space<vmem>>, vector<1x8x128xf32>
      %233 = vector.shape_cast %232 : vector<1x8x128xf32> to vector<8x128xf32>
      %234 = vector.shape_cast %231 : vector<8x128xf32> to vector<1x8x128xf32>
      tpu.vector_store %arg18[%c0_94, %c0_95, %c0_96], %234 {strides = array<i32>} : memref<1x8x128xf32, #tpu.memory_space<vmem>>, vector<1x8x128xf32>,
    } else {
    }
    return
  }
  func.func @transform_0(%arg0: i32, %arg1: i32) -> (i32, i32, i32) {
    %c0_i32 = arith.constant 0 : i32
    %c0_i32_0 = arith.constant 0 : i32
    %c0_i32_1 = arith.constant 0 : i32
    return %arg0, %c0_i32, %c0_i32_0 : i32, i32, i32
  }
  func.func @transform_1(%arg0: i32, %arg1: i32) -> (i32, i32, i32) {
    %c0_i32 = arith.constant 0 : i32
    %c0_i32_0 = arith.constant 0 : i32
    %c0_i32_1 = arith.constant 0 : i32
    return %arg1, %c0_i32, %c0_i32_0 : i32, i32, i32
  }
  func.func @transform_2(%arg0: i32, %arg1: i32) -> (i32, i32, i32) {
    %c0_i32 = arith.constant 0 : i32
    %c0_i32_0 = arith.constant 0 : i32
    %c0_i32_1 = arith.constant 0 : i32
    return %arg1, %c0_i32, %c0_i32_0 : i32, i32, i32
  }
  func.func @transform_3(%arg0: i32, %arg1: i32) -> (i32, i32, i32) {
    %c0_i32 = arith.constant 0 : i32
    %c0_i32_0 = arith.constant 0 : i32
    %c0_i32_1 = arith.constant 0 : i32
    return %arg1, %c0_i32, %c0_i32_0 : i32, i32, i32
  }
  func.func @transform_4(%arg0: i32, %arg1: i32) -> (i32, i32, i32) {
    %c0_i32 = arith.constant 0 : i32
    %c0_i32_0 = arith.constant 0 : i32
    %c0_i32_1 = arith.constant 0 : i32
    return %arg1, %c0_i32, %c0_i32_0 : i32, i32, i32
  }
  func.func @transform_5(%arg0: i32, %arg1: i32) -> (i32, i32, i32) {
    %c0_i32 = arith.constant 0 : i32
    %c0_i32_0 = arith.constant 0 : i32
    %c0_i32_1 = arith.constant 0 : i32
    return %arg1, %c0_i32, %c0_i32_0 : i32, i32, i32
  }
  func.func @transform_6(%arg0: i32, %arg1: i32) -> (i32, i32, i32) {
    %c0_i32 = arith.constant 0 : i32
    %c0_i32_0 = arith.constant 0 : i32
    %c0_i32_1 = arith.constant 0 : i32
    return %arg1, %c0_i32, %c0_i32_0 : i32, i32, i32
  }
  func.func @transform_7(%arg0: i32, %arg1: i32) -> (i32, i32, i32) {
    %c0_i32 = arith.constant 0 : i32
    %c0_i32_0 = arith.constant 0 : i32
    %c0_i32_1 = arith.constant 0 : i32
    return %arg1, %c0_i32, %c0_i32_0 : i32, i32, i32
  }
  func.func @transform_8(%arg0: i32, %arg1: i32) -> (i32, i32, i32) {
    %c0_i32 = arith.constant 0 : i32
    %c0_i32_0 = arith.constant 0 : i32
    %c0_i32_1 = arith.constant 0 : i32
    return %arg1, %c0_i32, %c0_i32_0 : i32, i32, i32
  }
  func.func @transform_9(%arg0: i32, %arg1: i32) -> (i32, i32, i32) {
    %c0_i32 = arith.constant 0 : i32
    %c0_i32_0 = arith.constant 0 : i32
    %c0_i32_1 = arith.constant 0 : i32
    return %arg1, %c0_i32, %c0_i32_0 : i32, i32, i32
  }
  func.func @transform_10(%arg0: i32, %arg1: i32) -> (i32, i32, i32) {
    %c0_i32 = arith.constant 0 : i32
    %c0_i32_0 = arith.constant 0 : i32
    %c0_i32_1 = arith.constant 0 : i32
    return %arg1, %c0_i32, %c0_i32_0 : i32, i32, i32
  }
  func.func @transform_11(%arg0: i32, %arg1: i32) -> (i32, i32, i32) {
    %c0_i32 = arith.constant 0 : i32
    %c0_i32_0 = arith.constant 0 : i32
    %c0_i32_1 = arith.constant 0 : i32
    return %arg1, %c0_i32, %c0_i32_0 : i32, i32, i32
  }
  func.func @transform_12(%arg0: i32, %arg1: i32) -> (i32, i32) {
    %c0_i32 = arith.constant 0 : i32
    %c0_i32_0 = arith.constant 0 : i32
    %c0_i32_1 = arith.constant 0 : i32
    return %c0_i32, %c0_i32_0 : i32, i32
  }
  func.func @transform_13(%arg0: i32, %arg1: i32) -> (i32, i32) {
    %c0_i32 = arith.constant 0 : i32
    %c0_i32_0 = arith.constant 0 : i32
    %c0_i32_1 = arith.constant 0 : i32
    return %c0_i32, %c0_i32_0 : i32, i32
  }
  func.func @transform_14(%arg0: i32, %arg1: i32) -> (i32, i32) {
    %c0_i32 = arith.constant 0 : i32
    %c0_i32_0 = arith.constant 0 : i32
    %c0_i32_1 = arith.constant 0 : i32
    return %c0_i32, %c0_i32_0 : i32, i32
  }
  func.func @transform_15(%arg0: i32, %arg1: i32) -> (i32, i32) {
    %c0_i32 = arith.constant 0 : i32
    %c0_i32_0 = arith.constant 0 : i32
    %c0_i32_1 = arith.constant 0 : i32
    return %c0_i32, %c0_i32_0 : i32, i32
  }
  func.func @transform_16(%arg0: i32, %arg1: i32) -> (i32, i32, i32) {
    %c0_i32 = arith.constant 0 : i32
    %c0_i32_0 = arith.constant 0 : i32
    %c0_i32_1 = arith.constant 0 : i32
    return %arg0, %c0_i32, %c0_i32_0 : i32, i32, i32
  }
}

</mosaic_0001>

<llo_original>
// kernel: gpt_forward.1
$region0: #{gpt_forward.1}
  #allocation0 [shape = 'u32[]', space=smem, size = 0x4, offset = 0x4, fixed_abs, tag = 'smem constant byte address 0x4 - core index']
  #allocation1 [shape = 'u32[72,128]{1,0:T(1,128)}', space=vmem, size = 0x9000, scoped, tag = 'internal scratch']
  #allocation2 [shape = 'f32[8,128]{1,0:T(8,128)}', space=vmem, size = 0x1000, scoped, tag = 'scratch operand']
  %s0 = inlined_call_operand.vmem [shape: f32[2,8,128], index: 0, kind: input, shape index: {}]
  %s1 = inlined_call_operand.vmem [shape: f32[6,1,128], index: 1, kind: input, shape index: {}]
  %s2 = inlined_call_operand.vmem [shape: f32[6,1,128], index: 2, kind: input, shape index: {}]
  %s3 = inlined_call_operand.hbm [shape: bf16[6,128,384], index: 3, kind: input, shape index: {}]
  %s4 = inlined_call_operand.hbm [shape: bf16[6,128,128], index: 4, kind: input, shape index: {}]
  %s5 = inlined_call_operand.vmem [shape: f32[6,1,128], index: 5, kind: input, shape index: {}]
  %s6 = inlined_call_operand.vmem [shape: f32[6,1,128], index: 6, kind: input, shape index: {}]
  %s7 = inlined_call_operand.vmem [shape: f32[6,1,128], index: 7, kind: input, shape index: {}]
  %s8 = inlined_call_operand.hbm [shape: bf16[6,128,512], index: 8, kind: input, shape index: {}]
  %s9 = inlined_call_operand.vmem [shape: f32[6,1,512], index: 9, kind: input, shape index: {}]
  %s10 = inlined_call_operand.hbm [shape: bf16[6,512,128], index: 10, kind: input, shape index: {}]
  %s11 = inlined_call_operand.vmem [shape: f32[6,1,128], index: 11, kind: input, shape index: {}]
  %s12 = inlined_call_operand.vmem [shape: f32[1,128], index: 12, kind: input, shape index: {}]
  %s13 = inlined_call_operand.vmem [shape: f32[1,128], index: 13, kind: input, shape index: {}]
  %s14 = inlined_call_operand.vmem [shape: bf16[128,128], index: 14, kind: input, shape index: {}]
  %s15 = inlined_call_operand.vmem [shape: f32[1,128], index: 15, kind: input, shape index: {}]
  %s16 = inlined_call_operand.hbm [shape: f32[2,8,128], index: 16, kind: output, shape index: {}]
  %s17 = sld [smem:[#allocation0]]
  $region121: #{gpt_forward.1} parent=0
    _
  %s19 = ssub.s32 1, %s17
  %s20 = scalar_select 0, %s19, %s17
  $region1: #{gpt_forward.1} parent=0
    #allocation3 [shape = 'u8[196608]{0}', space=vmem, size = 0x30000, scoped, tag = 'input window, operand 3']
    #allocation4 [shape = 's32[2]{0}', space=sflag, size = 0x8, scoped, tag = 'scoped memory for gpt_forward.1']
    #allocation5 [shape = 's32[2]{0}', space=sflag, size = 0x8, scoped, tag = 'scoped memory for gpt_forward.1']
    #allocation6 [shape = 'u8[65536]{0}', space=vmem, size = 0x10000, scoped, tag = 'input window, operand 4']
    #allocation7 [shape = 's32[2]{0}', space=sflag, size = 0x8, scoped, tag = 'scoped memory for gpt_forward.1']
    #allocation8 [shape = 'u8[262144]{0}', space=vmem, size = 0x40000, scoped, tag = 'input window, operand 8']
    #allocation9 [shape = 'u8[262144]{0}', space=vmem, size = 0x40000, scoped, tag = 'input window, operand 10']
    #allocation10 [shape = 's32[2]{0}', space=sflag, size = 0x8, scoped, tag = 'scoped memory for gpt_forward.1']
    #allocation11 [shape = 'u8[8192]{0}', space=vmem, size = 0x2000, scoped, tag = 'output window, operand 0']
    %21 = vsyncpa [#allocation4], 0
    %s22 = scalar_lea.sflag [#allocation4], 1
    %23 = vsyncpa %s22, 0
    %24 = vsyncpa [#allocation7], 0
    %s25 = scalar_lea.sflag [#allocation7], 1
    %26 = vsyncpa %s25, 0
    %27 = vsyncpa [#allocation10], 0
    %s28 = scalar_lea.sflag [#allocation10], 1
    %29 = vsyncpa %s28, 0
    %30 = vsyncpa [#allocation5], 0
    %s31 = scalar_lea.sflag [#allocation5], 1
    %32 = vsyncpa %s31, 0
    loop: start=0, step=1, limit=14
    $region2: #{gpt_forward.1} parent=1 // loop_pre_header
      _
    $region3: #{gpt_forward.1} parent=1 // loop_header
      %s34 = sphi 0, %s38
      %p35 = scmp.ge.s32.totalorder %s34, 14
      %s41 = sphi 0, %s53
      %s42 = sphi 0, %s49
      %s43 = sphi 0, %s41
      %s44 = sphi 0, %s42
      %s45 = sphi 0, %s43
      %s46 = sphi 0, %s44
      %s56 = sphi 0, %s58
      %s59 = sphi 0, %s56
      %s60 = sphi 0, %s59
      %s76 = sphi 0, %s60
      %s82 = sphi 0, %s84
      %s85 = sphi 0, %s82
      %s86 = sphi 0, %s85
      %s102 = sphi 0, %s86
      %s108 = sphi 0, %s110
      %s111 = sphi 0, %s108
      %s112 = sphi 0, %s111
      %s128 = sphi 0, %s112
      %s134 = sphi 0, %s136
      %s137 = sphi 0, %s134
      %s138 = sphi 0, %s137
      %s154 = sphi 0, %s138
      %s160 = sphi 0, %s162
      %s163 = sphi 0, %s160
      %s164 = sphi 0, %s163
      %s180 = sphi 0, %s164
      %s186 = sphi 0, %s188
      %s189 = sphi 0, %s186
      %s190 = sphi 0, %s189
      %s206 = sphi 0, %s190
      %s212 = sphi 0, %s214
      %s215 = sphi 0, %s212
      %s216 = sphi 0, %s215
      %s232 = sphi 0, %s216
      %s238 = sphi 0, %s240
      %s241 = sphi 0, %s238
      %s242 = sphi 0, %s241
      %s258 = sphi 0, %s242
      %s264 = sphi 0, %s266
      %s267 = sphi 0, %s264
      %s268 = sphi 0, %s267
      %s284 = sphi 0, %s268
      %s290 = sphi 0, %s292
      %s293 = sphi 0, %s290
      %s294 = sphi 0, %s293
      %s310 = sphi 0, %s294
      %s316 = sphi 0, %s318
      %s319 = sphi 0, %s316
      %s320 = sphi 0, %s319
      %s336 = sphi 0, %s320
      %s342 = sphi 0, %s344
      %s345 = sphi 0, %s342
      %s346 = sphi 0, %s345
      %s362 = sphi 0, %s346
      %s366 = sphi 0, %s366
      %s368 = sphi 0, %s366
      %s369 = sphi 0, %s368
      %s383 = sphi 0, %s369
      %s387 = sphi 0, %s387
      %s389 = sphi 0, %s387
      %s390 = sphi 0, %s389
      %s404 = sphi 0, %s390
      %s408 = sphi 0, %s408
      %s410 = sphi 0, %s408
      %s411 = sphi 0, %s410
      %s425 = sphi 0, %s411
      %s429 = sphi 0, %s429
      %s431 = sphi 0, %s429
      %s432 = sphi 0, %s431
      %s446 = sphi 0, %s432
      %s452 = sphi 0, %s454
      %s455 = sphi 0, %s452
      %s456 = sphi 0, %s455
      %s472 = sphi 0, %s456
    $region4: #{gpt_forward.1} parent=1 // loop_header_branch
      %37 = sbr.rel (%p35) target = $region8
    $region5: #{gpt_forward.1} parent=1 // loop_body
      %s39 = ssub.s32 %s34, 1
      %s40 = ssub.s32 %s34, 2
      %s47 = sadd.s32 1, %s42
      %p48 = scmp.ge.s32.totalorder %s47, 6
      %s49 = scalar_select %p48, 0, %s47
      %s50 = sadd.s32 1, %s41
      %s51 = scalar_select %p48, %s50, %s41
      %p52 = scmp.ge.s32.totalorder %s51, 2
      %s53 = scalar_select %p52, 0, %s51
      %s54 = ssub.s32 %s41, %s53
      %p55 = scmp.eq.s32.totalorder %s54, 0
      %s57 = sadd.s32 %s56, 1
      %s58 = scalar_select %p55, %s56, %s57
      %p61 = pneg %p55
      %p62 = scmp.eq.s32.totalorder %s34, 11
      %p63 = por %p61, %p62
      %p64 = scmp.ne.s32.totalorder %s56, %s59
      %p65 = scmp.eq.s32.totalorder %s34, 0
      %p66 = por %p64, %p65
      %p67 = scmp.ne.s32.totalorder %s56, %s59
      %p68 = scmp.eq.s32.totalorder %s39, 11
      %p69 = por %p67, %p68
      %p70 = scmp.ne.s32.totalorder %s59, %s60
      %p71 = scmp.eq.s32.totalorder %s39, 0
      %p72 = por %p70, %p71
      %p73 = scmp.ne.s32.totalorder %s59, %s60
      %p74 = scmp.eq.s32.totalorder %s40, 11
      %p75 = por %p73, %p74
      %p77 = scmp.ne.s32.totalorder %s60, %s76
      %p78 = scmp.eq.s32.totalorder %s40, 0
      %p79 = por %p77, %p78
      %s80 = ssub.s32 %s42, %s49
      %p81 = scmp.eq.s32.totalorder %s80, 0
      %s83 = sadd.s32 %s82, 1
      %s84 = scalar_select %p81, %s82, %s83
      %p87 = pneg %p81
      %p88 = scmp.eq.s32.totalorder %s34, 11
      %p89 = por %p87, %p88
      %p90 = scmp.ne.s32.totalorder %s82, %s85
      %p91 = scmp.eq.s32.totalorder %s34, 0
      %p92 = por %p90, %p91
      %p93 = scmp.ne.s32.totalorder %s82, %s85
      %p94 = scmp.eq.s32.totalorder %s39, 11
      %p95 = por %p93, %p94
      %p96 = scmp.ne.s32.totalorder %s85, %s86
      %p97 = scmp.eq.s32.totalorder %s39, 0
      %p98 = por %p96, %p97
      %p99 = scmp.ne.s32.totalorder %s85, %s86
      %p100 = scmp.eq.s32.totalorder %s40, 11
      %p101 = por %p99, %p100
      %p103 = scmp.ne.s32.totalorder %s86, %s102
      %p104 = scmp.eq.s32.totalorder %s40, 0
      %p105 = por %p103, %p104
      %s106 = ssub.s32 %s42, %s49
      %p107 = scmp.eq.s32.totalorder %s106, 0
      %s109 = sadd.s32 %s108, 1
      %s110 = scalar_select %p107, %s108, %s109
      %p113 = pneg %p107
      %p114 = scmp.eq.s32.totalorder %s34, 11
      %p115 = por %p113, %p114
      %p116 = scmp.ne.s32.totalorder %s108, %s111
      %p117 = scmp.eq.s32.totalorder %s34, 0
      %p118 = por %p116, %p117
      %p119 = scmp.ne.s32.totalorder %s108, %s111
      %p120 = scmp.eq.s32.totalorder %s39, 11
      %p121 = por %p119, %p120
      %p122 = scmp.ne.s32.totalorder %s111, %s112
      %p123 = scmp.eq.s32.totalorder %s39, 0
      %p124 = por %p122, %p123
      %p125 = scmp.ne.s32.totalorder %s111, %s112
      %p126 = scmp.eq.s32.totalorder %s40, 11
      %p127 = por %p125, %p126
      %p129 = scmp.ne.s32.totalorder %s112, %s128
      %p130 = scmp.eq.s32.totalorder %s40, 0
      %p131 = por %p129, %p130
      %s132 = ssub.s32 %s42, %s49
      %p133 = scmp.eq.s32.totalorder %s132, 0
      %s135 = sadd.s32 %s134, 1
      %s136 = scalar_select %p133, %s134, %s135
      %p139 = pneg %p133
      %p140 = scmp.eq.s32.totalorder %s34, 11
      %p141 = por %p139, %p140
      %p142 = scmp.ne.s32.totalorder %s134, %s137
      %p143 = scmp.eq.s32.totalorder %s34, 0
      %p144 = por %p142, %p143
      %p145 = scmp.ne.s32.totalorder %s134, %s137
      %p146 = scmp.eq.s32.totalorder %s39, 11
      %p147 = por %p145, %p146
      %p148 = scmp.ne.s32.totalorder %s137, %s138
      %p149 = scmp.eq.s32.totalorder %s39, 0
      %p150 = por %p148, %p149
      %p151 = scmp.ne.s32.totalorder %s137, %s138
      %p152 = scmp.eq.s32.totalorder %s40, 11
      %p153 = por %p151, %p152
      %p155 = scmp.ne.s32.totalorder %s138, %s154
      %p156 = scmp.eq.s32.totalorder %s40, 0
      %p157 = por %p155, %p156
      %s158 = ssub.s32 %s42, %s49
      %p159 = scmp.eq.s32.totalorder %s158, 0
      %s161 = sadd.s32 %s160, 1
      %s162 = scalar_select %p159, %s160, %s161
      %p165 = pneg %p159
      %p166 = scmp.eq.s32.totalorder %s34, 11
      %p167 = por %p165, %p166
      %p168 = scmp.ne.s32.totalorder %s160, %s163
      %p169 = scmp.eq.s32.totalorder %s34, 0
      %p170 = por %p168, %p169
      %p171 = scmp.ne.s32.totalorder %s160, %s163
      %p172 = scmp.eq.s32.totalorder %s39, 11
      %p173 = por %p171, %p172
      %p174 = scmp.ne.s32.totalorder %s163, %s164
      %p175 = scmp.eq.s32.totalorder %s39, 0
      %p176 = por %p174, %p175
      %p177 = scmp.ne.s32.totalorder %s163, %s164
      %p178 = scmp.eq.s32.totalorder %s40, 11
      %p179 = por %p177, %p178
      %p181 = scmp.ne.s32.totalorder %s164, %s180
      %p182 = scmp.eq.s32.totalorder %s40, 0
      %p183 = por %p181, %p182
      %s184 = ssub.s32 %s42, %s49
      %p185 = scmp.eq.s32.totalorder %s184, 0
      %s187 = sadd.s32 %s186, 1
      %s188 = scalar_select %p185, %s186, %s187
      %p191 = pneg %p185
      %p192 = scmp.eq.s32.totalorder %s34, 11
      %p193 = por %p191, %p192
      %p194 = scmp.ne.s32.totalorder %s186, %s189
      %p195 = scmp.eq.s32.totalorder %s34, 0
      %p196 = por %p194, %p195
      %p197 = scmp.ne.s32.totalorder %s186, %s189
      %p198 = scmp.eq.s32.totalorder %s39, 11
      %p199 = por %p197, %p198
      %p200 = scmp.ne.s32.totalorder %s189, %s190
      %p201 = scmp.eq.s32.totalorder %s39, 0
      %p202 = por %p200, %p201
      %p203 = scmp.ne.s32.totalorder %s189, %s190
      %p204 = scmp.eq.s32.totalorder %s40, 11
      %p205 = por %p203, %p204
      %p207 = scmp.ne.s32.totalorder %s190, %s206
      %p208 = scmp.eq.s32.totalorder %s40, 0
      %p209 = por %p207, %p208
      %s210 = ssub.s32 %s42, %s49
      %p211 = scmp.eq.s32.totalorder %s210, 0
      %s213 = sadd.s32 %s212, 1
      %s214 = scalar_select %p211, %s212, %s213
      %p217 = pneg %p211
      %p218 = scmp.eq.s32.totalorder %s34, 11
      %p219 = por %p217, %p218
      %p220 = scmp.ne.s32.totalorder %s212, %s215
      %p221 = scmp.eq.s32.totalorder %s34, 0
      %p222 = por %p220, %p221
      %p223 = scmp.ne.s32.totalorder %s212, %s215
      %p224 = scmp.eq.s32.totalorder %s39, 11
      %p225 = por %p223, %p224
      %p226 = scmp.ne.s32.totalorder %s215, %s216
      %p227 = scmp.eq.s32.totalorder %s39, 0
      %p228 = por %p226, %p227
      %p229 = scmp.ne.s32.totalorder %s215, %s216
      %p230 = scmp.eq.s32.totalorder %s40, 11
      %p231 = por %p229, %p230
      %p233 = scmp.ne.s32.totalorder %s216, %s232
      %p234 = scmp.eq.s32.totalorder %s40, 0
      %p235 = por %p233, %p234
      %s236 = ssub.s32 %s42, %s49
      %p237 = scmp.eq.s32.totalorder %s236, 0
      %s239 = sadd.s32 %s238, 1
      %s240 = scalar_select %p237, %s238, %s239
      %p243 = pneg %p237
      %p244 = scmp.eq.s32.totalorder %s34, 11
      %p245 = por %p243, %p244
      %p246 = scmp.ne.s32.totalorder %s238, %s241
      %p247 = scmp.eq.s32.totalorder %s34, 0
      %p248 = por %p246, %p247
      %p249 = scmp.ne.s32.totalorder %s238, %s241
      %p250 = scmp.eq.s32.totalorder %s39, 11
      %p251 = por %p249, %p250
      %p252 = scmp.ne.s32.totalorder %s241, %s242
      %p253 = scmp.eq.s32.totalorder %s39, 0
      %p254 = por %p252, %p253
      %p255 = scmp.ne.s32.totalorder %s241, %s242
      %p256 = scmp.eq.s32.totalorder %s40, 11
      %p257 = por %p255, %p256
      %p259 = scmp.ne.s32.totalorder %s242, %s258
      %p260 = scmp.eq.s32.totalorder %s40, 0
      %p261 = por %p259, %p260
      %s262 = ssub.s32 %s42, %s49
      %p263 = scmp.eq.s32.totalorder %s262, 0
      %s265 = sadd.s32 %s264, 1
      %s266 = scalar_select %p263, %s264, %s265
      %p269 = pneg %p263
      %p270 = scmp.eq.s32.totalorder %s34, 11
      %p271 = por %p269, %p270
      %p272 = scmp.ne.s32.totalorder %s264, %s267
      %p273 = scmp.eq.s32.totalorder %s34, 0
      %p274 = por %p272, %p273
      %p275 = scmp.ne.s32.totalorder %s264, %s267
      %p276 = scmp.eq.s32.totalorder %s39, 11
      %p277 = por %p275, %p276
      %p278 = scmp.ne.s32.totalorder %s267, %s268
      %p279 = scmp.eq.s32.totalorder %s39, 0
      %p280 = por %p278, %p279
      %p281 = scmp.ne.s32.totalorder %s267, %s268
      %p282 = scmp.eq.s32.totalorder %s40, 11
      %p283 = por %p281, %p282
      %p285 = scmp.ne.s32.totalorder %s268, %s284
      %p286 = scmp.eq.s32.totalorder %s40, 0
      %p287 = por %p285, %p286
      %s288 = ssub.s32 %s42, %s49
      %p289 = scmp.eq.s32.totalorder %s288, 0
      %s291 = sadd.s32 %s290, 1
      %s292 = scalar_select %p289, %s290, %s291
      %p295 = pneg %p289
      %p296 = scmp.eq.s32.totalorder %s34, 11
      %p297 = por %p295, %p296
      %p298 = scmp.ne.s32.totalorder %s290, %s293
      %p299 = scmp.eq.s32.totalorder %s34, 0
      %p300 = por %p298, %p299
      %p301 = scmp.ne.s32.totalorder %s290, %s293
      %p302 = scmp.eq.s32.totalorder %s39, 11
      %p303 = por %p301, %p302
      %p304 = scmp.ne.s32.totalorder %s293, %s294
      %p305 = scmp.eq.s32.totalorder %s39, 0
      %p306 = por %p304, %p305
      %p307 = scmp.ne.s32.totalorder %s293, %s294
      %p308 = scmp.eq.s32.totalorder %s40, 11
      %p309 = por %p307, %p308
      %p311 = scmp.ne.s32.totalorder %s294, %s310
      %p312 = scmp.eq.s32.totalorder %s40, 0
      %p313 = por %p311, %p312
      %s314 = ssub.s32 %s42, %s49
      %p315 = scmp.eq.s32.totalorder %s314, 0
      %s317 = sadd.s32 %s316, 1
      %s318 = scalar_select %p315, %s316, %s317
      %p321 = pneg %p315
      %p322 = scmp.eq.s32.totalorder %s34, 11
      %p323 = por %p321, %p322
      %p324 = scmp.ne.s32.totalorder %s316, %s319
      %p325 = scmp.eq.s32.totalorder %s34, 0
      %p326 = por %p324, %p325
      %p327 = scmp.ne.s32.totalorder %s316, %s319
      %p328 = scmp.eq.s32.totalorder %s39, 11
      %p329 = por %p327, %p328
      %p330 = scmp.ne.s32.totalorder %s319, %s320
      %p331 = scmp.eq.s32.totalorder %s39, 0
      %p332 = por %p330, %p331
      %p333 = scmp.ne.s32.totalorder %s319, %s320
      %p334 = scmp.eq.s32.totalorder %s40, 11
      %p335 = por %p333, %p334
      %p337 = scmp.ne.s32.totalorder %s320, %s336
      %p338 = scmp.eq.s32.totalorder %s40, 0
      %p339 = por %p337, %p338
      %s340 = ssub.s32 %s42, %s49
      %p341 = scmp.eq.s32.totalorder %s340, 0
      %s343 = sadd.s32 %s342, 1
      %s344 = scalar_select %p341, %s342, %s343
      %p347 = pneg %p341
      %p348 = scmp.eq.s32.totalorder %s34, 11
      %p349 = por %p347, %p348
      %p350 = scmp.ne.s32.totalorder %s342, %s345
      %p351 = scmp.eq.s32.totalorder %s34, 0
      %p352 = por %p350, %p351
      %p353 = scmp.ne.s32.totalorder %s342, %s345
      %p354 = scmp.eq.s32.totalorder %s39, 11
      %p355 = por %p353, %p354
      %p356 = scmp.ne.s32.totalorder %s345, %s346
      %p357 = scmp.eq.s32.totalorder %s39, 0
      %p358 = por %p356, %p357
      %p359 = scmp.ne.s32.totalorder %s345, %s346
      %p360 = scmp.eq.s32.totalorder %s40, 11
      %p361 = por %p359, %p360
      %p363 = scmp.ne.s32.totalorder %s346, %s362
      %p364 = scmp.eq.s32.totalorder %s40, 0
      %p365 = por %p363, %p364
      %s367 = sadd.s32 %s366, 1
      %p370 = scmp.eq.s32.totalorder %s34, 11
      %p371 = scmp.ne.s32.totalorder %s366, %s368
      %p372 = scmp.eq.s32.totalorder %s34, 0
      %p373 = por %p371, %p372
      %p374 = scmp.ne.s32.totalorder %s366, %s368
      %p375 = scmp.eq.s32.totalorder %s39, 11
      %p376 = por %p374, %p375
      %p377 = scmp.ne.s32.totalorder %s368, %s369
      %p378 = scmp.eq.s32.totalorder %s39, 0
      %p379 = por %p377, %p378
      %p380 = scmp.ne.s32.totalorder %s368, %s369
      %p381 = scmp.eq.s32.totalorder %s40, 11
      %p382 = por %p380, %p381
      %p384 = scmp.ne.s32.totalorder %s369, %s383
      %p385 = scmp.eq.s32.totalorder %s40, 0
      %p386 = por %p384, %p385
      %s388 = sadd.s32 %s387, 1
      %p391 = scmp.eq.s32.totalorder %s34, 11
      %p392 = scmp.ne.s32.totalorder %s387, %s389
      %p393 = scmp.eq.s32.totalorder %s34, 0
      %p394 = por %p392, %p393
      %p395 = scmp.ne.s32.totalorder %s387, %s389
      %p396 = scmp.eq.s32.totalorder %s39, 11
      %p397 = por %p395, %p396
      %p398 = scmp.ne.s32.totalorder %s389, %s390
      %p399 = scmp.eq.s32.totalorder %s39, 0
      %p400 = por %p398, %p399
      %p401 = scmp.ne.s32.totalorder %s389, %s390
      %p402 = scmp.eq.s32.totalorder %s40, 11
      %p403 = por %p401, %p402
      %p405 = scmp.ne.s32.totalorder %s390, %s404
      %p406 = scmp.eq.s32.totalorder %s40, 0
      %p407 = por %p405, %p406
      %s409 = sadd.s32 %s408, 1
      %p412 = scmp.eq.s32.totalorder %s34, 11
      %p413 = scmp.ne.s32.totalorder %s408, %s410
      %p414 = scmp.eq.s32.totalorder %s34, 0
      %p415 = por %p413, %p414
      %p416 = scmp.ne.s32.totalorder %s408, %s410
      %p417 = scmp.eq.s32.totalorder %s39, 11
      %p418 = por %p416, %p417
      %p419 = scmp.ne.s32.totalorder %s410, %s411
      %p420 = scmp.eq.s32.totalorder %s39, 0
      %p421 = por %p419, %p420
      %p422 = scmp.ne.s32.totalorder %s410, %s411
      %p423 = scmp.eq.s32.totalorder %s40, 11
      %p424 = por %p422, %p423
      %p426 = scmp.ne.s32.totalorder %s411, %s425
      %p427 = scmp.eq.s32.totalorder %s40, 0
      %p428 = por %p426, %p427
      %s430 = sadd.s32 %s429, 1
      %p433 = scmp.eq.s32.totalorder %s34, 11
      %p434 = scmp.ne.s32.totalorder %s429, %s431
      %p435 = scmp.eq.s32.totalorder %s34, 0
      %p436 = por %p434, %p435
      %p437 = scmp.ne.s32.totalorder %s429, %s431
      %p438 = scmp.eq.s32.totalorder %s39, 11
      %p439 = por %p437, %p438
      %p440 = scmp.ne.s32.totalorder %s431, %s432
      %p441 = scmp.eq.s32.totalorder %s39, 0
      %p442 = por %p440, %p441
      %p443 = scmp.ne.s32.totalorder %s431, %s432
      %p444 = scmp.eq.s32.totalorder %s40, 11
      %p445 = por %p443, %p444
      %p447 = scmp.ne.s32.totalorder %s432, %s446
      %p448 = scmp.eq.s32.totalorder %s40, 0
      %p449 = por %p447, %p448
      %s450 = ssub.s32 %s41, %s53
      %p451 = scmp.eq.s32.totalorder %s450, 0
      %s453 = sadd.s32 %s452, 1
      %s454 = scalar_select %p451, %s452, %s453
      %p457 = pneg %p451
      %p458 = scmp.eq.s32.totalorder %s34, 11
      %p459 = por %p457, %p458
      %p460 = scmp.ne.s32.totalorder %s452, %s455
      %p461 = scmp.eq.s32.totalorder %s34, 0
      %p462 = por %p460, %p461
      %p463 = scmp.ne.s32.totalorder %s452, %s455
      %p464 = scmp.eq.s32.totalorder %s39, 11
      %p465 = por %p463, %p464
      %p466 = scmp.ne.s32.totalorder %s455, %s456
      %p467 = scmp.eq.s32.totalorder %s39, 0
      %p468 = por %p466, %p467
      %p469 = scmp.ne.s32.totalorder %s455, %s456
      %p470 = scmp.eq.s32.totalorder %s40, 11
      %p471 = por %p469, %p470
      %p473 = scmp.ne.s32.totalorder %s456, %s472
      %p474 = scmp.eq.s32.totalorder %s40, 0
      %p475 = por %p473, %p474
      %p476 = scmp.le.s32.totalorder 1, %s34
      %p477 = scmp.lt.s32.totalorder %s34, 13
      %p478 = pnand %p476, %p477
      %p479 = pneg %p478
      // Predicated region
      $region9: #{gpt_forward.1} parent=5 // pred_check
        _
      $region10: #{gpt_forward.1} parent=5 // pred_check_branch
        %481 = sbr.rel (%p478) target = $region12
      $region11: #{gpt_forward.1} parent=5 // pred_region
        %s482 = ssub.s32 %s34, 1
        // Predicated region
        $region13: #{gpt_forward.1} parent=11 // pred_check
          %p483 = pneg %p379
        $region14: #{gpt_forward.1} parent=11 // pred_check_branch
          %485 = sbr.rel (%p483) target = $region16
        $region15: #{gpt_forward.1} parent=11 // pred_region
          _
        $region16: #{gpt_forward.1} parent=11 // pred_fallthru
          _
        // Predicated region
        $region17: #{gpt_forward.1} parent=11 // pred_check
          %p486 = pneg %p400
        $region18: #{gpt_forward.1} parent=11 // pred_check_branch
          %488 = sbr.rel (%p486) target = $region20
        $region19: #{gpt_forward.1} parent=11 // pred_region
          _
        $region20: #{gpt_forward.1} parent=11 // pred_fallthru
          _
        // Predicated region
        $region21: #{gpt_forward.1} parent=11 // pred_check
          %p489 = pneg %p421
        $region22: #{gpt_forward.1} parent=11 // pred_check_branch
          %491 = sbr.rel (%p489) target = $region24
        $region23: #{gpt_forward.1} parent=11 // pred_region
          _
        $region24: #{gpt_forward.1} parent=11 // pred_fallthru
          _
        // Predicated region
        $region25: #{gpt_forward.1} parent=11 // pred_check
          %p492 = pneg %p442
        $region26: #{gpt_forward.1} parent=11 // pred_check_branch
          %494 = sbr.rel (%p492) target = $region28
        $region27: #{gpt_forward.1} parent=11 // pred_region
          _
        $region28: #{gpt_forward.1} parent=11 // pred_fallthru
          _
      $region12: #{gpt_forward.1} parent=5 // pred_fallthru
        _
      %p495 = scmp.lt.s32.totalorder %s34, 12
      // Predicated region
      $region29: #{gpt_forward.1} parent=5 // pred_check
        %p496 = pneg %p495
      $region30: #{gpt_forward.1} parent=5 // pred_check_branch
        %498 = sbr.rel (%p496) target = $region32
      $region31: #{gpt_forward.1} parent=5 // pred_region
        // Predicated region
        $region33: #{gpt_forward.1} parent=31 // pred_check
          %p499 = pneg %p66
        $region34: #{gpt_forward.1} parent=31 // pred_check_branch
          %501 = sbr.rel (%p499) target = $region36
        $region35: #{gpt_forward.1} parent=31 // pred_region
          %p502 = scmp.lt.s32.totalorder %s41, 1
          %s503 = scalar_select %p502, %s41, 1
          %s504 = smul.addr %s503, 8
          %s505 = scalar_lea.vmem %s0, %s504
        $region36: #{gpt_forward.1} parent=31 // pred_fallthru
          _
        // Predicated region
        $region37: #{gpt_forward.1} parent=31 // pred_check
          %p506 = pneg %p92
        $region38: #{gpt_forward.1} parent=31 // pred_check_branch
          %508 = sbr.rel (%p506) target = $region40
        $region39: #{gpt_forward.1} parent=31 // pred_region
          %p509 = scmp.lt.s32.totalorder %s42, 5
          %s510 = scalar_select %p509, %s42, 5
          %s511 = scalar_lea.vmem %s1, %s510
        $region40: #{gpt_forward.1} parent=31 // pred_fallthru
          _
        // Predicated region
        $region41: #{gpt_forward.1} parent=31 // pred_check
          %p512 = pneg %p118
        $region42: #{gpt_forward.1} parent=31 // pred_check_branch
          %514 = sbr.rel (%p512) target = $region44
        $region43: #{gpt_forward.1} parent=31 // pred_region
          %p515 = scmp.lt.s32.totalorder %s42, 5
          %s516 = scalar_select %p515, %s42, 5
          %s517 = scalar_lea.vmem %s2, %s516
        $region44: #{gpt_forward.1} parent=31 // pred_fallthru
          _
        // Predicated region
        $region45: #{gpt_forward.1} parent=31 // pred_check
          %p518 = pneg %p144
        $region46: #{gpt_forward.1} parent=31 // pred_check_branch
          %520 = sbr.rel (%p518) target = $region48
        $region47: #{gpt_forward.1} parent=31 // pred_region
          %s521 = sand.u32 %s134, 1
          %s522 = scalar_lea.sflag [#allocation4], %s521
          %s523 = sand.u32 %s134, 1
          %s524 = smul.addr %s523, 192
          %s525 = scalar_lea.vmem [#allocation3], %s524
          %527 = vsyncadd %s522, 0
          %s528 = smul.addr %s42, 48
          %s529 = smul.addr %s528, 4
          %s530 = scalar_lea.hbm %s3, %s529
          %s531 = sshll.u32 %s530, 4
          %s532 = int_to_ptr.hbm [resolvable:$true] %s531
          %s533 = sshll.u32 %s525, 4
          %s534 = int_to_ptr.vmem [resolvable:$true] %s533
          %539 = dma.hbm_to_vmem [thread:$0]  %s532, 3072, %s534, %s522, 192, 192, 12
        $region48: #{gpt_forward.1} parent=31 // pred_fallthru
          _
        // Predicated region
        $region49: #{gpt_forward.1} parent=31 // pred_check
          %p540 = pneg %p170
        $region50: #{gpt_forward.1} parent=31 // pred_check_branch
          %542 = sbr.rel (%p540) target = $region52
        $region51: #{gpt_forward.1} parent=31 // pred_region
          %s543 = sand.u32 %s34, 1
          %s544 = scalar_lea.sflag [#allocation7], %s543
          %s545 = sand.u32 %s160, 1
          %s546 = smul.addr %s545, 64
          %s547 = scalar_lea.vmem [#allocation6], %s546
          %549 = vsyncadd %s544, 0
          %s550 = smul.addr %s42, 16
          %s551 = smul.addr %s550, 4
          %s552 = scalar_lea.hbm %s4, %s551
          %s553 = sshll.u32 %s552, 4
          %s554 = int_to_ptr.hbm [resolvable:$true] %s553
          %s555 = sshll.u32 %s547, 4
          %s556 = int_to_ptr.vmem [resolvable:$true] %s555
          %561 = dma.hbm_to_vmem [thread:$0]  %s554, 1024, %s556, %s544, 64, 64, 4
        $region52: #{gpt_forward.1} parent=31 // pred_fallthru
          _
        // Predicated region
        $region53: #{gpt_forward.1} parent=31 // pred_check
          %p562 = pneg %p196
        $region54: #{gpt_forward.1} parent=31 // pred_check_branch
          %564 = sbr.rel (%p562) target = $region56
        $region55: #{gpt_forward.1} parent=31 // pred_region
          %p565 = scmp.lt.s32.totalorder %s42, 5
          %s566 = scalar_select %p565, %s42, 5
          %s567 = scalar_lea.vmem %s5, %s566
        $region56: #{gpt_forward.1} parent=31 // pred_fallthru
          _
        // Predicated region
        $region57: #{gpt_forward.1} parent=31 // pred_check
          %p568 = pneg %p222
        $region58: #{gpt_forward.1} parent=31 // pred_check_branch
          %570 = sbr.rel (%p568) target = $region60
        $region59: #{gpt_forward.1} parent=31 // pred_region
          %p571 = scmp.lt.s32.totalorder %s42, 5
          %s572 = scalar_select %p571, %s42, 5
          %s573 = scalar_lea.vmem %s6, %s572
        $region60: #{gpt_forward.1} parent=31 // pred_fallthru
          _
        // Predicated region
        $region61: #{gpt_forward.1} parent=31 // pred_check
          %p574 = pneg %p248
        $region62: #{gpt_forward.1} parent=31 // pred_check_branch
          %576 = sbr.rel (%p574) target = $region64
        $region63: #{gpt_forward.1} parent=31 // pred_region
          %p577 = scmp.lt.s32.totalorder %s42, 5
          %s578 = scalar_select %p577, %s42, 5
          %s579 = scalar_lea.vmem %s7, %s578
        $region64: #{gpt_forward.1} parent=31 // pred_fallthru
          _
        // Predicated region
        $region65: #{gpt_forward.1} parent=31 // pred_check
          %p580 = pneg %p274
        $region66: #{gpt_forward.1} parent=31 // pred_check_branch
          %582 = sbr.rel (%p580) target = $region68
        $region67: #{gpt_forward.1} parent=31 // pred_region
          %s583 = sand.u32 %s34, 1
          %s584 = scalar_lea.sflag [#allocation7], %s583
          %s585 = sand.u32 %s264, 1
          %s586 = smul.addr %s585, 256
          %s587 = scalar_lea.vmem [#allocation8], %s586
          %589 = vsyncadd %s584, 0
          %s590 = smul.addr %s42, 64
          %s591 = smul.addr %s590, 4
          %s592 = scalar_lea.hbm %s8, %s591
          %s593 = sshll.u32 %s592, 4
          %s594 = int_to_ptr.hbm [resolvable:$true] %s593
          %s595 = sshll.u32 %s587, 4
          %s596 = int_to_ptr.vmem [resolvable:$true] %s595
          %601 = dma.hbm_to_vmem [thread:$0]  %s594, 4096, %s596, %s584, 256, 256, 16
        $region68: #{gpt_forward.1} parent=31 // pred_fallthru
          _
        // Predicated region
        $region69: #{gpt_forward.1} parent=31 // pred_check
          %p602 = pneg %p300
        $region70: #{gpt_forward.1} parent=31 // pred_check_branch
          %604 = sbr.rel (%p602) target = $region72
        $region71: #{gpt_forward.1} parent=31 // pred_region
          %p605 = scmp.lt.s32.totalorder %s42, 5
          %s606 = scalar_select %p605, %s42, 5
          %s607 = smul.addr %s606, 4
          %s608 = scalar_lea.vmem %s9, %s607
        $region72: #{gpt_forward.1} parent=31 // pred_fallthru
          _
        // Predicated region
        $region73: #{gpt_forward.1} parent=31 // pred_check
          %p609 = pneg %p326
        $region74: #{gpt_forward.1} parent=31 // pred_check_branch
          %611 = sbr.rel (%p609) target = $region76
        $region75: #{gpt_forward.1} parent=31 // pred_region
          %s612 = sand.u32 %s316, 1
          %s613 = scalar_lea.sflag [#allocation10], %s612
          %s614 = sand.u32 %s316, 1
          %s615 = smul.addr %s614, 256
          %s616 = scalar_lea.vmem [#allocation9], %s615
          %618 = vsyncadd %s613, 0
          %s619 = smul.addr %s42, 64
          %s620 = smul.addr %s619, 4
          %s621 = scalar_lea.hbm %s10, %s620
          %s622 = sshll.u32 %s621, 4
          %s623 = int_to_ptr.hbm [resolvable:$true] %s622
          %s624 = sshll.u32 %s616, 4
          %s625 = int_to_ptr.vmem [resolvable:$true] %s624
          %630 = dma.hbm_to_vmem [thread:$0]  %s623, 4096, %s625, %s613, 64, 64, 4
        $region76: #{gpt_forward.1} parent=31 // pred_fallthru
          _
        // Predicated region
        $region77: #{gpt_forward.1} parent=31 // pred_check
          %p631 = pneg %p352
        $region78: #{gpt_forward.1} parent=31 // pred_check_branch
          %633 = sbr.rel (%p631) target = $region80
        $region79: #{gpt_forward.1} parent=31 // pred_region
          %p634 = scmp.lt.s32.totalorder %s42, 5
          %s635 = scalar_select %p634, %s42, 5
          %s636 = scalar_lea.vmem %s11, %s635
        $region80: #{gpt_forward.1} parent=31 // pred_fallthru
          _
      $region32: #{gpt_forward.1} parent=5 // pred_fallthru
        _
      %p637 = scmp.le.s32.totalorder 1, %s34
      %p638 = scmp.lt.s32.totalorder %s34, 13
      %p639 = pnand %p637, %p638
      %p640 = pneg %p639
      // Predicated region
      $region81: #{gpt_forward.1} parent=5 // pred_check
        _
      $region82: #{gpt_forward.1} parent=5 // pred_check_branch
        %642 = sbr.rel (%p639) target = $region84
      $region83: #{gpt_forward.1} parent=5 // pred_region
        %s643 = ssub.s32 %s34, 1
        %s644 = sand.u32 %s137, 1
        %s645 = scalar_lea.sflag [#allocation4], %s644
        %s646 = sand.u32 %s137, 1
        %s647 = smul.addr %s646, 192
        %s648 = scalar_lea.vmem [#allocation3], %s647
        // Predicated region
        $region85: #{gpt_forward.1} parent=83 // pred_check
          %p649 = pneg %p150
        $region86: #{gpt_forward.1} parent=83 // pred_check_branch
          %651 = sbr.rel (%p649) target = $region88
        $region87: #{gpt_forward.1} parent=83 // pred_region
          %653 = dma.done %s645, 3072
        $region88: #{gpt_forward.1} parent=83 // pred_fallthru
          _
        %s654 = sand.u32 %s39, 1
        %s655 = scalar_lea.sflag [#allocation7], %s654
        %s656 = sand.u32 %s163, 1
        %s657 = smul.addr %s656, 64
        %s658 = scalar_lea.vmem [#allocation6], %s657
        // Predicated region
        $region89: #{gpt_forward.1} parent=83 // pred_check
          %p659 = pneg %p176
        $region90: #{gpt_forward.1} parent=83 // pred_check_branch
          %661 = sbr.rel (%p659) target = $region92
        $region91: #{gpt_forward.1} parent=83 // pred_region
          %663 = dma.done %s655, 1024
        $region92: #{gpt_forward.1} parent=83 // pred_fallthru
          _
        %s664 = sand.u32 %s39, 1
        %s665 = scalar_lea.sflag [#allocation7], %s664
        %s666 = sand.u32 %s267, 1
        %s667 = smul.addr %s666, 256
        %s668 = scalar_lea.vmem [#allocation8], %s667
        // Predicated region
        $region93: #{gpt_forward.1} parent=83 // pred_check
          %p669 = pneg %p280
        $region94: #{gpt_forward.1} parent=83 // pred_check_branch
          %671 = sbr.rel (%p669) target = $region96
        $region95: #{gpt_forward.1} parent=83 // pred_region
          %673 = dma.done %s665, 4096
        $region96: #{gpt_forward.1} parent=83 // pred_fallthru
          _
        %s674 = sand.u32 %s319, 1
        %s675 = scalar_lea.sflag [#allocation10], %s674
        %s676 = sand.u32 %s319, 1
        %s677 = smul.addr %s676, 256
        %s678 = scalar_lea.vmem [#allocation9], %s677
        // Predicated region
        $region97: #{gpt_forward.1} parent=83 // pred_check
          %p679 = pneg %p332
        $region98: #{gpt_forward.1} parent=83 // pred_check_branch
          %681 = sbr.rel (%p679) target = $region100
        $region99: #{gpt_forward.1} parent=83 // pred_region
          %683 = dma.done %s675, 4096
        $region100: #{gpt_forward.1} parent=83 // pred_fallthru
          _
        %p684 = scmp.lt.s32.totalorder %s43, 1
        %s685 = scalar_select %p684, %s43, 1
        %s686 = smul.addr %s685, 8
        %s687 = scalar_lea.vmem %s0, %s686
        %p688 = pneg %p72
        %p689 = pneg %p69
        %p690 = scmp.lt.s32.totalorder %s44, 5
        %s691 = scalar_select %p690, %s44, 5
        %s692 = scalar_lea.vmem %s1, %s691
        %p693 = pneg %p98
        %p694 = pneg %p95
        %p695 = scmp.lt.s32.totalorder %s44, 5
        %s696 = scalar_select %p695, %s44, 5
        %s697 = scalar_lea.vmem %s2, %s696
        %p698 = pneg %p124
        %p699 = pneg %p121
        %s700 = sand.u32 %s137, 1
        %s701 = scalar_lea.sflag [#allocation4], %s700
        %s702 = sand.u32 %s137, 1
        %s703 = smul.addr %s702, 192
        %s704 = scalar_lea.vmem [#allocation3], %s703
        %p705 = pneg %p150
        %p706 = pneg %p147
        %s707 = sand.u32 %s39, 1
        %s708 = scalar_lea.sflag [#allocation7], %s707
        %s709 = sand.u32 %s163, 1
        %s710 = smul.addr %s709, 64
        %s711 = scalar_lea.vmem [#allocation6], %s710
        %p712 = pneg %p176
        %p713 = pneg %p173
        %p714 = scmp.lt.s32.totalorder %s44, 5
        %s715 = scalar_select %p714, %s44, 5
        %s716 = scalar_lea.vmem %s5, %s715
        %p717 = pneg %p202
        %p718 = pneg %p199
        %p719 = scmp.lt.s32.totalorder %s44, 5
        %s720 = scalar_select %p719, %s44, 5
        %s721 = scalar_lea.vmem %s6, %s720
        %p722 = pneg %p228
        %p723 = pneg %p225
        %p724 = scmp.lt.s32.totalorder %s44, 5
        %s725 = scalar_select %p724, %s44, 5
        %s726 = scalar_lea.vmem %s7, %s725
        %p727 = pneg %p254
        %p728 = pneg %p251
        %s729 = sand.u32 %s39, 1
        %s730 = scalar_lea.sflag [#allocation7], %s729
        %s731 = sand.u32 %s267, 1
        %s732 = smul.addr %s731, 256
        %s733 = scalar_lea.vmem [#allocation8], %s732
        %p734 = pneg %p280
        %p735 = pneg %p277
        %p736 = scmp.lt.s32.totalorder %s44, 5
        %s737 = scalar_select %p736, %s44, 5
        %s738 = smul.addr %s737, 4
        %s739 = scalar_lea.vmem %s9, %s738
        %p740 = pneg %p306
        %p741 = pneg %p303
        %s742 = sand.u32 %s319, 1
        %s743 = scalar_lea.sflag [#allocation10], %s742
        %s744 = sand.u32 %s319, 1
        %s745 = smul.addr %s744, 256
        %s746 = scalar_lea.vmem [#allocation9], %s745
        %p747 = pneg %p332
        %p748 = pneg %p329
        %p749 = scmp.lt.s32.totalorder %s44, 5
        %s750 = scalar_select %p749, %s44, 5
        %s751 = scalar_lea.vmem %s11, %s750
        %p752 = pneg %p358
        %p753 = pneg %p355
        %p754 = pneg %p379
        %p755 = pneg %p376
        %p756 = pneg %p400
        %p757 = pneg %p397
        %p758 = pneg %p421
        %p759 = pneg %p418
        %p760 = pneg %p442
        %p761 = pneg %p439
        %p762 = pneg %p468
        %p763 = pneg %p465
        %s764 = sand.u32 %s455, 1
        %s765 = scalar_lea.sflag [#allocation5], %s764
        %s766 = sand.u32 %s455, 1
        %s767 = smul.addr %s766, 8
        %s768 = scalar_lea.vmem [#allocation11], %s767
        %p769 = scmp.lt.s32.totalorder %s43, 1
        %s770 = scalar_select %p769, %s43, 1
        %s771 = smul.addr %s770, 8
        %s772 = scalar_lea.vmem %s0, %s771
        %p773 = scmp.lt.s32.totalorder %s44, 5
        %s774 = scalar_select %p773, %s44, 5
        %s775 = scalar_lea.vmem %s1, %s774
        %p776 = scmp.lt.s32.totalorder %s44, 5
        %s777 = scalar_select %p776, %s44, 5
        %s778 = scalar_lea.vmem %s2, %s777
        %p779 = scmp.lt.s32.totalorder %s44, 5
        %s780 = scalar_select %p779, %s44, 5
        %s781 = scalar_lea.vmem %s5, %s780
        %p782 = scmp.lt.s32.totalorder %s44, 5
        %s783 = scalar_select %p782, %s44, 5
        %s784 = scalar_lea.vmem %s6, %s783
        %p785 = scmp.lt.s32.totalorder %s44, 5
        %s786 = scalar_select %p785, %s44, 5
        %s787 = scalar_lea.vmem %s7, %s786
        %p788 = scmp.lt.s32.totalorder %s44, 5
        %s789 = scalar_select %p788, %s44, 5
        %s790 = smul.addr %s789, 4
        %s791 = scalar_lea.vmem %s9, %s790
        %p792 = scmp.lt.s32.totalorder %s44, 5
        %s793 = scalar_select %p792, %s44, 5
        %s794 = scalar_lea.vmem %s11, %s793
        %p796 = scmp.eq.s32.totalorder %s44, 0
        // Predicated region
        $region101: #{gpt_forward.1} parent=83 // pred_check
          %p797 = pneg %p796
        $region102: #{gpt_forward.1} parent=83 // pred_check_branch
          %799 = sbr.rel (%p797) target = $region104
        $region103: #{gpt_forward.1} parent=83 // pred_region
          %v800 = vld [vmem:[%s772] sm:$0xff]
          %801 = vst [vmem:[#allocation2] sm:$0xff] %v800
        $region104: #{gpt_forward.1} parent=83 // pred_fallthru
          _
        %v802 = vld [vmem:[#allocation2] sm:$0xff]
        %v803 = vld [vmem:[%s775] sm:$0x1]
        %v804 = vld [vmem:[%s778] sm:$0x1]
        %805 = vadd.xlane.f32.xlu0 %v802
        %v806 = vpop.xlane.xlu0 %805
        %v807 = vrcp.pop 128.0
        %v808 = vmul.f32 128.0, %v807
        %v809 = vsub.f32 1.0, %v808
        %v810 = vmul.f32 %v807, %v809
        %v811 = vadd.f32 %v807, %v810
        %vm812 = vweird.f32 %v807
        %v813 = vsel %vm812, %v807, %v811
        %v814 = vmul.f32 %v806, %v813
        %v815 = vsub.f32 %v802, %v814
        %v816 = vmul.f32 %v815, %v815
        %817 = vadd.xlane.f32.xlu0 %v816
        %v818 = vpop.xlane.xlu0 %817
        %v819 = vmul.f32 %v818, %v813
        %v820 = vadd.f32 %v819, 1e-05
        %v821 = vrsqrt.pop %v820
        %v822 = vmul.f32 %v821, %v820
        %v823 = vmul.f32 %v822, %v821
        %v824 = vmul.f32 0.5, %v823
        %v825 = vsub.f32 1.5, %v824
        %v826 = vmul.f32 %v821, %v825
        %vm827 = vweird.f32 %v820
        %vm828 = vweird.f32 %v821
        %vm829 = vmor %vm827, %vm828
        %v830 = vsel %vm829, %v821, %v826
        %v831 = vmul.f32 %v815, %v830
        %v833 = vperm.slane %v803, 0
        %v835 = vmul.f32 %v831, %v833
        %v837 = vperm.slane %v804, 0
        %v839 = vadd.f32 %v835, %v837
        %v840 = vpack.c.bf16 %v839, %v839
        %v841 = vld [vmem:[%s648] sm:$0xff]
        %v842 = vld [vmem:[%s648 + $0x8] sm:$0xf]
        %v843 = vld [vmem:[%s648 + $0xc] sm:$0xff]
        %v844 = vld [vmem:[%s648 + $0x14] sm:$0xf]
        %v845 = vld [vmem:[%s648 + $0x18] sm:$0xff]
        %v846 = vld [vmem:[%s648 + $0x20] sm:$0xf]
        %v847 = vld [vmem:[%s648 + $0x24] sm:$0xff]
        %v848 = vld [vmem:[%s648 + $0x2c] sm:$0xf]
        %v849 = vld [vmem:[%s648 + $0x30] sm:$0xff]
        %v850 = vld [vmem:[%s648 + $0x38] sm:$0xf]
        %v851 = vld [vmem:[%s648 + $0x3c] sm:$0xff]
        %v852 = vld [vmem:[%s648 + $0x44] sm:$0xf]
        %v853 = vld [vmem:[%s648 + $0x48] sm:$0xff]
        %v854 = vld [vmem:[%s648 + $0x50] sm:$0xf]
        %v855 = vld [vmem:[%s648 + $0x54] sm:$0xff]
        %v856 = vld [vmem:[%s648 + $0x5c] sm:$0xf]
        %v857 = vld [vmem:[%s648 + $0x60] sm:$0xff]
        %v858 = vld [vmem:[%s648 + $0x68] sm:$0xf]
        %v859 = vld [vmem:[%s648 + $0x6c] sm:$0xff]
        %v860 = vld [vmem:[%s648 + $0x74] sm:$0xf]
        %v861 = vld [vmem:[%s648 + $0x78] sm:$0xff]
        %v862 = vld [vmem:[%s648 + $0x80] sm:$0xf]
        %v863 = vld [vmem:[%s648 + $0x84] sm:$0xff]
        %v864 = vld [vmem:[%s648 + $0x8c] sm:$0xf]
        %v865 = vld [vmem:[%s648 + $0x90] sm:$0xff]
        %v866 = vld [vmem:[%s648 + $0x98] sm:$0xf]
        %v867 = vld [vmem:[%s648 + $0x9c] sm:$0xff]
        %v868 = vld [vmem:[%s648 + $0xa4] sm:$0xf]
        %v869 = vld [vmem:[%s648 + $0xa8] sm:$0xff]
        %v870 = vld [vmem:[%s648 + $0xb0] sm:$0xf]
        %v871 = vld [vmem:[%s648 + $0xb4] sm:$0xff]
        %v872 = vld [vmem:[%s648 + $0xbc] sm:$0xf]
        %v905 = vunpack.c.l.b16 %v841
        %v906 = vunpack.c.h.b16 %v841
        %v907 = vunpack.c.l.b16 %v842
        %v908 = vunpack.c.l.b16 %v843
        %v909 = vunpack.c.h.b16 %v843
        %v910 = vunpack.c.l.b16 %v844
        %v911 = vunpack.c.l.b16 %v845
        %v912 = vunpack.c.h.b16 %v845
        %v913 = vunpack.c.l.b16 %v846
        %v914 = vunpack.c.l.b16 %v847
        %v915 = vunpack.c.h.b16 %v847
        %v916 = vunpack.c.l.b16 %v848
        %v917 = vunpack.c.l.b16 %v849
        %v918 = vunpack.c.h.b16 %v849
        %v919 = vunpack.c.l.b16 %v850
        %v920 = vunpack.c.l.b16 %v851
        %v921 = vunpack.c.h.b16 %v851
        %v922 = vunpack.c.l.b16 %v852
        %v923 = vunpack.c.l.b16 %v853
        %v924 = vunpack.c.h.b16 %v853
        %v925 = vunpack.c.l.b16 %v854
        %v926 = vunpack.c.l.b16 %v855
        %v927 = vunpack.c.h.b16 %v855
        %v928 = vunpack.c.l.b16 %v856
        %v929 = vunpack.c.l.b16 %v857
        %v930 = vunpack.c.h.b16 %v857
        %v931 = vunpack.c.l.b16 %v858
        %v932 = vunpack.c.l.b16 %v859
        %v933 = vunpack.c.h.b16 %v859
        %v934 = vunpack.c.l.b16 %v860
        %v935 = vunpack.c.l.b16 %v861
        %v936 = vunpack.c.h.b16 %v861
        %v937 = vunpack.c.l.b16 %v862
        %v938 = vunpack.c.l.b16 %v863
        %v939 = vunpack.c.h.b16 %v863
        %v940 = vunpack.c.l.b16 %v864
        %v941 = vunpack.c.l.b16 %v865
        %v942 = vunpack.c.h.b16 %v865
        %v943 = vunpack.c.l.b16 %v866
        %v944 = vunpack.c.l.b16 %v867
        %v945 = vunpack.c.h.b16 %v867
        %v946 = vunpack.c.l.b16 %v868
        %v947 = vunpack.c.l.b16 %v869
        %v948 = vunpack.c.h.b16 %v869
        %v949 = vunpack.c.l.b16 %v870
        %v950 = vunpack.c.l.b16 %v871
        %v951 = vunpack.c.h.b16 %v871
        %v952 = vunpack.c.l.b16 %v872
        %v953 = vpack.c.b16 %v908, %v905
        %v954 = vpack.c.b16 %v909, %v906
        %v955 = vpack.c.b16 %v910, %v907
        %v956 = vpack.c.b16 %v914, %v911
        %v957 = vpack.c.b16 %v915, %v912
        %v958 = vpack.c.b16 %v916, %v913
        %v959 = vpack.c.b16 %v920, %v917
        %v960 = vpack.c.b16 %v921, %v918
        %v961 = vpack.c.b16 %v922, %v919
        %v962 = vpack.c.b16 %v926, %v923
        %v963 = vpack.c.b16 %v927, %v924
        %v964 = vpack.c.b16 %v928, %v925
        %v965 = vpack.c.b16 %v932, %v929
        %v966 = vpack.c.b16 %v933, %v930
        %v967 = vpack.c.b16 %v934, %v931
        %v968 = vpack.c.b16 %v938, %v935
        %v969 = vpack.c.b16 %v939, %v936
        %v970 = vpack.c.b16 %v940, %v937
        %v971 = vpack.c.b16 %v944, %v941
        %v972 = vpack.c.b16 %v945, %v942
        %v973 = vpack.c.b16 %v946, %v943
        %v974 = vpack.c.b16 %v950, %v947
        %v975 = vpack.c.b16 %v951, %v948
        %v976 = vpack.c.b16 %v952, %v949
        %1001 = vmatpush.bf16.msra.mxu0 %v974
        %1002 = vmatpush.bf16.msra.mxu0 %v971
        %1003 = vmatpush.bf16.msra.mxu0 %v968
        %1004 = vmatpush.bf16.msra.mxu0 %v965
        %1005 = vmatpush.bf16.msra.mxu0 %v962
        %1006 = vmatpush.bf16.msra.mxu0 %v959
        %1007 = vmatpush.bf16.msra.mxu0 %v956
        %1008 = vmatpush.bf16.msra.mxu0 %v953
        %1009 = vmatmul.bf16.gmra.mxu0 %v840
        %v1010 = vpop.f32.mrf.mxu0
        %v1011 = vadd.f32 0.0, %v1010
        %v1012 = vpop.f32.mrf.mxu0
        %1013 = vdwg.mxu0
        %1014 = vmatpush.bf16.msra.mxu0 %v975
        %1015 = vmatpush.bf16.msra.mxu0 %v972
        %1016 = vmatpush.bf16.msra.mxu0 %v969
        %1017 = vmatpush.bf16.msra.mxu0 %v966
        %1018 = vmatpush.bf16.msra.mxu0 %v963
        %1019 = vmatpush.bf16.msra.mxu0 %v960
        %1020 = vmatpush.bf16.msra.mxu0 %v957
        %1021 = vmatpush.bf16.msra.mxu0 %v954
        %1022 = vmatmul.bf16.gmra.mxu0 %v840
        %v1023 = vpop.f32.mrf.mxu0
        %v1024 = vadd.f32 0.0, %v1023
        %v1025 = vpop.f32.mrf.mxu0
        %1026 = vdwg.mxu0
        %1027 = vmatpush.bf16.msra.mxu0 %v976
        %1028 = vmatpush.bf16.msra.mxu0 %v973
        %1029 = vmatpush.bf16.msra.mxu0 %v970
        %1030 = vmatpush.bf16.msra.mxu0 %v967
        %1031 = vmatpush.bf16.msra.mxu0 %v964
        %1032 = vmatpush.bf16.msra.mxu0 %v961
        %1033 = vmatpush.bf16.msra.mxu0 %v958
        %1034 = vmatpush.bf16.msra.mxu0 %v955
        %1035 = vmatmul.bf16.gmra.mxu0 %v840
        %v1036 = vpop.f32.mrf.mxu0
        %v1037 = vadd.f32 0.0, %v1036
        %v1038 = vpop.f32.mrf.mxu0
        %1039 = vdwg.mxu0
        %v1040 = vlaneseq
        %v1041 = vshrl.u32 %v1040, 7
        %v1042 = vlaneseq
        %v1043 = vand.u32 %v1042, 127
        %vm1044 = vcmp.le.s32.totalorder %v1043, %v1041
        %v1045 = vld [vmem:[%s658] sm:$0xf]
        %v1046 = vld [vmem:[%s658 + $0x4] sm:$0xf]
        %v1047 = vld [vmem:[%s658 + $0x8] sm:$0xf]
        %v1048 = vld [vmem:[%s658 + $0xc] sm:$0xf]
        %v1049 = vld [vmem:[%s658 + $0x10] sm:$0xf]
        %v1050 = vld [vmem:[%s658 + $0x14] sm:$0xf]
        %v1051 = vld [vmem:[%s658 + $0x18] sm:$0xf]
        %v1052 = vld [vmem:[%s658 + $0x1c] sm:$0xf]
        %v1053 = vld [vmem:[%s658 + $0x20] sm:$0xf]
        %v1054 = vld [vmem:[%s658 + $0x24] sm:$0xf]
        %v1055 = vld [vmem:[%s658 + $0x28] sm:$0xf]
        %v1056 = vld [vmem:[%s658 + $0x2c] sm:$0xf]
        %v1057 = vld [vmem:[%s658 + $0x30] sm:$0xf]
        %v1058 = vld [vmem:[%s658 + $0x34] sm:$0xf]
        %v1059 = vld [vmem:[%s658 + $0x38] sm:$0xf]
        %v1060 = vld [vmem:[%s658 + $0x3c] sm:$0xf]
        %v1061 = vpack.c.bf16 %v1011, %v1011
        %v1062 = vpack.c.bf16 %v1024, %v1024
        %v1063 = vpack.c.bf16 %v1037, %v1037
        %vm1064 = vcmask 261120
        %v1066 = vsel %vm1064, %v1061, 0
        %v1069 = vsel %vm1064, %v1062, 0
        %1071 = vmatpush.bf16.xpose.msra.mxu0 0
        %1072 = vmatpush.bf16.xpose.msra.mxu0 0
        %1073 = vmatpush.bf16.xpose.msra.mxu0 0
        %1074 = vmatpush.bf16.xpose.msra.mxu0 0
        %1075 = vmatpush.bf16.xpose.msra.mxu0 0
        %1076 = vmatpush.bf16.xpose.msra.mxu0 0
        %1077 = vmatpush.bf16.xpose.msra.mxu0 0
        %1078 = vmatpush.bf16.xpose.msra.mxu0 %v1069
        %1079 = vmatmul.bf16.gmra.mxu0 %v1066
        %v1080 = vpop.f32.mrf.mxu0
        %v1081 = vadd.f32 0.0, %v1080
        %v1082 = vpop.f32.mrf.mxu0
        %1083 = vdwg.mxu0
        %v1084 = vmul.f32 %v1081, 0.088388346
        %v1085 = vsel %vm1044, %v1084, -1e+30
        %vm1086 = vcmask 64512
        %v1087 = vsel %vm1086, %v1085, -inf
        %1088 = vmax.xlane.f32.xlu0 %v1087
        %v1089 = vpop.xlane.xlu0 %1088
        %v1090 = vsub.f32 %v1085, %v1089
        %v1091 = vmul.f32 %v1090, 1.442695
        %v1092 = vpow.pop %v1091
        %v1093 = vsel %vm1086, %v1092, 0.0
        %1094 = vadd.xlane.f32.xlu0 %v1093
        %v1095 = vpop.xlane.xlu0 %1094
        %v1096 = vrcp.pop %v1095
        %v1097 = vmul.f32 %v1092, %v1096
        %v1098 = vpack.c.bf16 %v1097, %v1097
        %v1100 = vsel %vm1086, %v1098, 0
        %vm1102 = vcmask 1043456
        %v1104 = vsel %vm1102, %v1063, 0
        %1106 = vmatpush.bf16.msra.mxu0 0
        %1107 = vmatpush.bf16.msra.mxu0 0
        %1108 = vmatpush.bf16.msra.mxu0 0
        %1109 = vmatpush.bf16.msra.mxu0 0
        %1110 = vmatpush.bf16.msra.mxu0 0
        %1111 = vmatpush.bf16.msra.mxu0 0
        %1112 = vmatpush.bf16.msra.mxu0 0
        %1113 = vmatpush.bf16.msra.mxu0 %v1104
        %1114 = vmatmul.bf16.gmra.mxu0 %v1100
        %v1115 = vpop.f32.mrf.mxu0
        %v1116 = vadd.f32 0.0, %v1115
        %v1117 = vpop.f32.mrf.mxu0
        %1118 = vdwg.mxu0
        %v1119 = vpack.c.bf16 %v1116, %v1116
        %1121 = vrot.lane.b32.xlu0 %v1061, 96
        %v1122 = vpop.permute.xlu0 %1121
        %1124 = vrot.lane.b32.xlu0 %v1062, 96
        %v1125 = vpop.permute.xlu0 %1124
        %v1127 = vsel %vm1064, %v1122, 0
        %v1130 = vsel %vm1064, %v1125, 0
        %1132 = vmatpush.bf16.xpose.msra.mxu0 0
        %1133 = vmatpush.bf16.xpose.msra.mxu0 0
        %1134 = vmatpush.bf16.xpose.msra.mxu0 0
        %1135 = vmatpush.bf16.xpose.msra.mxu0 0
        %1136 = vmatpush.bf16.xpose.msra.mxu0 0
        %1137 = vmatpush.bf16.xpose.msra.mxu0 0
        %1138 = vmatpush.bf16.xpose.msra.mxu0 0
        %1139 = vmatpush.bf16.xpose.msra.mxu0 %v1130
        %1140 = vmatmul.bf16.gmra.mxu0 %v1127
        %v1141 = vpop.f32.mrf.mxu0
        %v1142 = vadd.f32 0.0, %v1141
        %v1143 = vpop.f32.mrf.mxu0
        %1144 = vdwg.mxu0
        %v1145 = vmul.f32 %v1142, 0.088388346
        %v1146 = vsel %vm1044, %v1145, -1e+30
        %v1147 = vsel %vm1086, %v1146, -inf
        %1148 = vmax.xlane.f32.xlu0 %v1147
        %v1149 = vpop.xlane.xlu0 %1148
        %v1150 = vsub.f32 %v1146, %v1149
        %v1151 = vmul.f32 %v1150, 1.442695
        %v1152 = vpow.pop %v1151
        %v1153 = vsel %vm1086, %v1152, 0.0
        %1154 = vadd.xlane.f32.xlu0 %v1153
        %v1155 = vpop.xlane.xlu0 %1154
        %v1156 = vrcp.pop %v1155
        %v1157 = vmul.f32 %v1152, %v1156
        %v1158 = vpack.c.bf16 %v1157, %v1157
        %1160 = vrot.lane.b32.xlu0 %v1063, 96
        %v1161 = vpop.permute.xlu0 %1160
        %v1163 = vsel %vm1086, %v1158, 0
        %v1166 = vsel %vm1102, %v1161, 0
        %1168 = vmatpush.bf16.msra.mxu0 0
        %1169 = vmatpush.bf16.msra.mxu0 0
        %1170 = vmatpush.bf16.msra.mxu0 0
        %1171 = vmatpush.bf16.msra.mxu0 0
        %1172 = vmatpush.bf16.msra.mxu0 0
        %1173 = vmatpush.bf16.msra.mxu0 0
        %1174 = vmatpush.bf16.msra.mxu0 0
        %1175 = vmatpush.bf16.msra.mxu0 %v1166
        %1176 = vmatmul.bf16.gmra.mxu0 %v1163
        %v1177 = vpop.f32.mrf.mxu0
        %v1178 = vadd.f32 0.0, %v1177
        %v1179 = vpop.f32.mrf.mxu0
        %1180 = vdwg.mxu0
        %v1181 = vpack.c.bf16 %v1178, %v1178
        %v1186 = vunpack.c.l.b16 %v1049
        %v1187 = vunpack.c.l.b16 %v1050
        %v1188 = vunpack.c.l.b16 %v1051
        %v1189 = vunpack.c.l.b16 %v1052
        %v1190 = vpack.c.b16 %v1187, %v1186
        %v1191 = vpack.c.b16 %v1189, %v1188
        %v1195 = vsel %vm1064, %v1181, 0
        %1197 = vmatpush.bf16.msra.mxu0 0
        %1198 = vmatpush.bf16.msra.mxu0 0
        %1199 = vmatpush.bf16.msra.mxu0 0
        %1200 = vmatpush.bf16.msra.mxu0 0
        %1201 = vmatpush.bf16.msra.mxu0 0
        %1202 = vmatpush.bf16.msra.mxu0 0
        %1203 = vmatpush.bf16.msra.mxu0 %v1191
        %1204 = vmatpush.bf16.msra.mxu0 %v1190
        %1205 = vmatmul.bf16.gmra.mxu0 %v1195
        %v1206 = vpop.f32.mrf.mxu0
        %v1207 = vadd.f32 0.0, %v1206
        %v1208 = vpop.f32.mrf.mxu0
        %1209 = vdwg.mxu0
        %v1214 = vunpack.c.l.b16 %v1045
        %v1215 = vunpack.c.l.b16 %v1046
        %v1216 = vunpack.c.l.b16 %v1047
        %v1217 = vunpack.c.l.b16 %v1048
        %v1218 = vpack.c.b16 %v1215, %v1214
        %v1219 = vpack.c.b16 %v1217, %v1216
        %v1223 = vsel %vm1064, %v1119, 0
        %1225 = vmatpush.bf16.msra.mxu0 0
        %1226 = vmatpush.bf16.msra.mxu0 0
        %1227 = vmatpush.bf16.msra.mxu0 0
        %1228 = vmatpush.bf16.msra.mxu0 0
        %1229 = vmatpush.bf16.msra.mxu0 0
        %1230 = vmatpush.bf16.msra.mxu0 0
        %1231 = vmatpush.bf16.msra.mxu0 %v1219
        %1232 = vmatpush.bf16.msra.mxu0 %v1218
        %1233 = vmatmul.bf16.gmra.mxu0 %v1223
        %v1234 = vpop.f32.mrf.mxu0
        %v1235 = vadd.f32 %v1207, %v1234
        %v1236 = vpop.f32.mrf.mxu0
        %1237 = vdwg.mxu0
        %1238 = vrot.lane.b32.xlu0 %v1061, 64
        %v1239 = vpop.permute.xlu0 %1238
        %1240 = vrot.lane.b32.xlu0 %v1062, 64
        %v1241 = vpop.permute.xlu0 %1240
        %v1243 = vsel %vm1064, %v1239, 0
        %v1246 = vsel %vm1064, %v1241, 0
        %1248 = vmatpush.bf16.xpose.msra.mxu0 0
        %1249 = vmatpush.bf16.xpose.msra.mxu0 0
        %1250 = vmatpush.bf16.xpose.msra.mxu0 0
        %1251 = vmatpush.bf16.xpose.msra.mxu0 0
        %1252 = vmatpush.bf16.xpose.msra.mxu0 0
        %1253 = vmatpush.bf16.xpose.msra.mxu0 0
        %1254 = vmatpush.bf16.xpose.msra.mxu0 0
        %1255 = vmatpush.bf16.xpose.msra.mxu0 %v1246
        %1256 = vmatmul.bf16.gmra.mxu0 %v1243
        %v1257 = vpop.f32.mrf.mxu0
        %v1258 = vadd.f32 0.0, %v1257
        %v1259 = vpop.f32.mrf.mxu0
        %1260 = vdwg.mxu0
        %v1261 = vmul.f32 %v1258, 0.088388346
        %v1262 = vsel %vm1044, %v1261, -1e+30
        %v1263 = vsel %vm1086, %v1262, -inf
        %1264 = vmax.xlane.f32.xlu0 %v1263
        %v1265 = vpop.xlane.xlu0 %1264
        %v1266 = vsub.f32 %v1262, %v1265
        %v1267 = vmul.f32 %v1266, 1.442695
        %v1268 = vpow.pop %v1267
        %v1269 = vsel %vm1086, %v1268, 0.0
        %1270 = vadd.xlane.f32.xlu0 %v1269
        %v1271 = vpop.xlane.xlu0 %1270
        %v1272 = vrcp.pop %v1271
        %v1273 = vmul.f32 %v1268, %v1272
        %v1274 = vpack.c.bf16 %v1273, %v1273
        %1275 = vrot.lane.b32.xlu0 %v1063, 64
        %v1276 = vpop.permute.xlu0 %1275
        %v1278 = vsel %vm1086, %v1274, 0
        %v1281 = vsel %vm1102, %v1276, 0
        %1283 = vmatpush.bf16.msra.mxu0 0
        %1284 = vmatpush.bf16.msra.mxu0 0
        %1285 = vmatpush.bf16.msra.mxu0 0
        %1286 = vmatpush.bf16.msra.mxu0 0
        %1287 = vmatpush.bf16.msra.mxu0 0
        %1288 = vmatpush.bf16.msra.mxu0 0
        %1289 = vmatpush.bf16.msra.mxu0 0
        %1290 = vmatpush.bf16.msra.mxu0 %v1281
        %1291 = vmatmul.bf16.gmra.mxu0 %v1278
        %v1292 = vpop.f32.mrf.mxu0
        %v1293 = vadd.f32 0.0, %v1292
        %v1294 = vpop.f32.mrf.mxu0
        %1295 = vdwg.mxu0
        %v1296 = vpack.c.bf16 %v1293, %v1293
        %v1301 = vunpack.c.l.b16 %v1053
        %v1302 = vunpack.c.l.b16 %v1054
        %v1303 = vunpack.c.l.b16 %v1055
        %v1304 = vunpack.c.l.b16 %v1056
        %v1305 = vpack.c.b16 %v1302, %v1301
        %v1306 = vpack.c.b16 %v1304, %v1303
        %v1310 = vsel %vm1064, %v1296, 0
        %1312 = vmatpush.bf16.msra.mxu0 0
        %1313 = vmatpush.bf16.msra.mxu0 0
        %1314 = vmatpush.bf16.msra.mxu0 0
        %1315 = vmatpush.bf16.msra.mxu0 0
        %1316 = vmatpush.bf16.msra.mxu0 0
        %1317 = vmatpush.bf16.msra.mxu0 0
        %1318 = vmatpush.bf16.msra.mxu0 %v1306
        %1319 = vmatpush.bf16.msra.mxu0 %v1305
        %1320 = vmatmul.bf16.gmra.mxu0 %v1310
        %v1321 = vpop.f32.mrf.mxu0
        %v1322 = vadd.f32 0.0, %v1321
        %v1323 = vpop.f32.mrf.mxu0
        %1324 = vdwg.mxu0
        %v1325 = vadd.f32 %v1235, %v1322
        %1326 = vrot.lane.b32.xlu0 %v1061, 32
        %v1327 = vpop.permute.xlu0 %1326
        %1328 = vrot.lane.b32.xlu0 %v1062, 32
        %v1329 = vpop.permute.xlu0 %1328
        %v1331 = vsel %vm1064, %v1327, 0
        %v1334 = vsel %vm1064, %v1329, 0
        %1336 = vmatpush.bf16.xpose.msra.mxu0 0
        %1337 = vmatpush.bf16.xpose.msra.mxu0 0
        %1338 = vmatpush.bf16.xpose.msra.mxu0 0
        %1339 = vmatpush.bf16.xpose.msra.mxu0 0
        %1340 = vmatpush.bf16.xpose.msra.mxu0 0
        %1341 = vmatpush.bf16.xpose.msra.mxu0 0
        %1342 = vmatpush.bf16.xpose.msra.mxu0 0
        %1343 = vmatpush.bf16.xpose.msra.mxu0 %v1334
        %1344 = vmatmul.bf16.gmra.mxu0 %v1331
        %v1345 = vpop.f32.mrf.mxu0
        %v1346 = vadd.f32 0.0, %v1345
        %v1347 = vpop.f32.mrf.mxu0
        %1348 = vdwg.mxu0
        %v1349 = vmul.f32 %v1346, 0.088388346
        %v1350 = vsel %vm1044, %v1349, -1e+30
        %v1351 = vsel %vm1086, %v1350, -inf
        %1352 = vmax.xlane.f32.xlu0 %v1351
        %v1353 = vpop.xlane.xlu0 %1352
        %v1354 = vsub.f32 %v1350, %v1353
        %v1355 = vmul.f32 %v1354, 1.442695
        %v1356 = vpow.pop %v1355
        %v1357 = vsel %vm1086, %v1356, 0.0
        %1358 = vadd.xlane.f32.xlu0 %v1357
        %v1359 = vpop.xlane.xlu0 %1358
        %v1360 = vrcp.pop %v1359
        %v1361 = vmul.f32 %v1356, %v1360
        %v1362 = vpack.c.bf16 %v1361, %v1361
        %1363 = vrot.lane.b32.xlu0 %v1063, 32
        %v1364 = vpop.permute.xlu0 %1363
        %v1366 = vsel %vm1086, %v1362, 0
        %v1369 = vsel %vm1102, %v1364, 0
        %1371 = vmatpush.bf16.msra.mxu0 0
        %1372 = vmatpush.bf16.msra.mxu0 0
        %1373 = vmatpush.bf16.msra.mxu0 0
        %1374 = vmatpush.bf16.msra.mxu0 0
        %1375 = vmatpush.bf16.msra.mxu0 0
        %1376 = vmatpush.bf16.msra.mxu0 0
        %1377 = vmatpush.bf16.msra.mxu0 0
        %1378 = vmatpush.bf16.msra.mxu0 %v1369
        %1379 = vmatmul.bf16.gmra.mxu0 %v1366
        %v1380 = vpop.f32.mrf.mxu0
        %v1381 = vadd.f32 0.0, %v1380
        %v1382 = vpop.f32.mrf.mxu0
        %1383 = vdwg.mxu0
        %v1384 = vpack.c.bf16 %v1381, %v1381
        %v1389 = vunpack.c.l.b16 %v1057
        %v1390 = vunpack.c.l.b16 %v1058
        %v1391 = vunpack.c.l.b16 %v1059
        %v1392 = vunpack.c.l.b16 %v1060
        %v1393 = vpack.c.b16 %v1390, %v1389
        %v1394 = vpack.c.b16 %v1392, %v1391
        %v1398 = vsel %vm1064, %v1384, 0
        %1400 = vmatpush.bf16.msra.mxu0 0
        %1401 = vmatpush.bf16.msra.mxu0 0
        %1402 = vmatpush.bf16.msra.mxu0 0
        %1403 = vmatpush.bf16.msra.mxu0 0
        %1404 = vmatpush.bf16.msra.mxu0 0
        %1405 = vmatpush.bf16.msra.mxu0 0
        %1406 = vmatpush.bf16.msra.mxu0 %v1394
        %1407 = vmatpush.bf16.msra.mxu0 %v1393
        %1408 = vmatmul.bf16.gmra.mxu0 %v1398
        %v1409 = vpop.f32.mrf.mxu0
        %v1410 = vadd.f32 0.0, %v1409
        %v1411 = vpop.f32.mrf.mxu0
        %1412 = vdwg.mxu0
        %v1413 = vadd.f32 %v1325, %v1410
        %v1414 = vadd.f32 %v802, %v1413
        %v1415 = vld [vmem:[%s781] sm:$0x1]
        %v1417 = vperm.slane %v1415, 0
        %v1419 = vadd.f32 %v1414, %v1417
        %v1420 = vld [vmem:[%s784] sm:$0x1]
        %v1421 = vld [vmem:[%s787] sm:$0x1]
        %1422 = vadd.xlane.f32.xlu0 %v1419
        %v1423 = vpop.xlane.xlu0 %1422
        %v1424 = vmul.f32 %v1423, %v813
        %v1425 = vsub.f32 %v1419, %v1424
        %v1426 = vmul.f32 %v1425, %v1425
        %1427 = vadd.xlane.f32.xlu0 %v1426
        %v1428 = vpop.xlane.xlu0 %1427
        %v1429 = vmul.f32 %v1428, %v813
        %v1430 = vadd.f32 %v1429, 1e-05
        %v1431 = vrsqrt.pop %v1430
        %v1432 = vmul.f32 %v1431, %v1430
        %v1433 = vmul.f32 %v1432, %v1431
        %v1434 = vmul.f32 0.5, %v1433
        %v1435 = vsub.f32 1.5, %v1434
        %v1436 = vmul.f32 %v1431, %v1435
        %vm1437 = vweird.f32 %v1430
        %vm1438 = vweird.f32 %v1431
        %vm1439 = vmor %vm1437, %vm1438
        %v1440 = vsel %vm1439, %v1431, %v1436
        %v1441 = vmul.f32 %v1425, %v1440
        %v1443 = vperm.slane %v1420, 0
        %v1445 = vmul.f32 %v1441, %v1443
        %v1447 = vperm.slane %v1421, 0
        %v1449 = vadd.f32 %v1445, %v1447
        %v1450 = vpack.c.bf16 %v1449, %v1449
        %v1451 = vld [vmem:[%s668] sm:$0xff]
        %v1452 = vld [vmem:[%s668 + $0x8] sm:$0xff]
        %v1453 = vld [vmem:[%s668 + $0x10] sm:$0xff]
        %v1454 = vld [vmem:[%s668 + $0x18] sm:$0xff]
        %v1455 = vld [vmem:[%s668 + $0x20] sm:$0xff]
        %v1456 = vld [vmem:[%s668 + $0x28] sm:$0xff]
        %v1457 = vld [vmem:[%s668 + $0x30] sm:$0xff]
        %v1458 = vld [vmem:[%s668 + $0x38] sm:$0xff]
        %v1459 = vld [vmem:[%s668 + $0x40] sm:$0xff]
        %v1460 = vld [vmem:[%s668 + $0x48] sm:$0xff]
        %v1461 = vld [vmem:[%s668 + $0x50] sm:$0xff]
        %v1462 = vld [vmem:[%s668 + $0x58] sm:$0xff]
        %v1463 = vld [vmem:[%s668 + $0x60] sm:$0xff]
        %v1464 = vld [vmem:[%s668 + $0x68] sm:$0xff]
        %v1465 = vld [vmem:[%s668 + $0x70] sm:$0xff]
        %v1466 = vld [vmem:[%s668 + $0x78] sm:$0xff]
        %v1467 = vld [vmem:[%s668 + $0x80] sm:$0xff]
        %v1468 = vld [vmem:[%s668 + $0x88] sm:$0xff]
        %v1469 = vld [vmem:[%s668 + $0x90] sm:$0xff]
        %v1470 = vld [vmem:[%s668 + $0x98] sm:$0xff]
        %v1471 = vld [vmem:[%s668 + $0xa0] sm:$0xff]
        %v1472 = vld [vmem:[%s668 + $0xa8] sm:$0xff]
        %v1473 = vld [vmem:[%s668 + $0xb0] sm:$0xff]
        %v1474 = vld [vmem:[%s668 + $0xb8] sm:$0xff]
        %v1475 = vld [vmem:[%s668 + $0xc0] sm:$0xff]
        %v1476 = vld [vmem:[%s668 + $0xc8] sm:$0xff]
        %v1477 = vld [vmem:[%s668 + $0xd0] sm:$0xff]
        %v1478 = vld [vmem:[%s668 + $0xd8] sm:$0xff]
        %v1479 = vld [vmem:[%s668 + $0xe0] sm:$0xff]
        %v1480 = vld [vmem:[%s668 + $0xe8] sm:$0xff]
        %v1481 = vld [vmem:[%s668 + $0xf0] sm:$0xff]
        %v1482 = vld [vmem:[%s668 + $0xf8] sm:$0xff]
        %v1483 = vld [vmem:[%s791] sm:$0xf]
        %v1485 = vperm.slane %v1483, 0
        %v1486 = vperm.slane %v1483, 1
        %v1487 = vperm.slane %v1483, 2
        %v1488 = vperm.slane %v1483, 3
        %v1525 = vunpack.c.l.b16 %v1451
        %v1526 = vunpack.c.h.b16 %v1451
        %v1527 = vunpack.c.l.b16 %v1452
        %v1528 = vunpack.c.h.b16 %v1452
        %v1529 = vunpack.c.l.b16 %v1453
        %v1530 = vunpack.c.h.b16 %v1453
        %v1531 = vunpack.c.l.b16 %v1454
        %v1532 = vunpack.c.h.b16 %v1454
        %v1533 = vunpack.c.l.b16 %v1455
        %v1534 = vunpack.c.h.b16 %v1455
        %v1535 = vunpack.c.l.b16 %v1456
        %v1536 = vunpack.c.h.b16 %v1456
        %v1537 = vunpack.c.l.b16 %v1457
        %v1538 = vunpack.c.h.b16 %v1457
        %v1539 = vunpack.c.l.b16 %v1458
        %v1540 = vunpack.c.h.b16 %v1458
        %v1541 = vunpack.c.l.b16 %v1459
        %v1542 = vunpack.c.h.b16 %v1459
        %v1543 = vunpack.c.l.b16 %v1460
        %v1544 = vunpack.c.h.b16 %v1460
        %v1545 = vunpack.c.l.b16 %v1461
        %v1546 = vunpack.c.h.b16 %v1461
        %v1547 = vunpack.c.l.b16 %v1462
        %v1548 = vunpack.c.h.b16 %v1462
        %v1549 = vunpack.c.l.b16 %v1463
        %v1550 = vunpack.c.h.b16 %v1463
        %v1551 = vunpack.c.l.b16 %v1464
        %v1552 = vunpack.c.h.b16 %v1464
        %v1553 = vunpack.c.l.b16 %v1465
        %v1554 = vunpack.c.h.b16 %v1465
        %v1555 = vunpack.c.l.b16 %v1466
        %v1556 = vunpack.c.h.b16 %v1466
        %v1557 = vunpack.c.l.b16 %v1467
        %v1558 = vunpack.c.h.b16 %v1467
        %v1559 = vunpack.c.l.b16 %v1468
        %v1560 = vunpack.c.h.b16 %v1468
        %v1561 = vunpack.c.l.b16 %v1469
        %v1562 = vunpack.c.h.b16 %v1469
        %v1563 = vunpack.c.l.b16 %v1470
        %v1564 = vunpack.c.h.b16 %v1470
        %v1565 = vunpack.c.l.b16 %v1471
        %v1566 = vunpack.c.h.b16 %v1471
        %v1567 = vunpack.c.l.b16 %v1472
        %v1568 = vunpack.c.h.b16 %v1472
        %v1569 = vunpack.c.l.b16 %v1473
        %v1570 = vunpack.c.h.b16 %v1473
        %v1571 = vunpack.c.l.b16 %v1474
        %v1572 = vunpack.c.h.b16 %v1474
        %v1573 = vunpack.c.l.b16 %v1475
        %v1574 = vunpack.c.h.b16 %v1475
        %v1575 = vunpack.c.l.b16 %v1476
        %v1576 = vunpack.c.h.b16 %v1476
        %v1577 = vunpack.c.l.b16 %v1477
        %v1578 = vunpack.c.h.b16 %v1477
        %v1579 = vunpack.c.l.b16 %v1478
        %v1580 = vunpack.c.h.b16 %v1478
        %v1581 = vunpack.c.l.b16 %v1479
        %v1582 = vunpack.c.h.b16 %v1479
        %v1583 = vunpack.c.l.b16 %v1480
        %v1584 = vunpack.c.h.b16 %v1480
        %v1585 = vunpack.c.l.b16 %v1481
        %v1586 = vunpack.c.h.b16 %v1481
        %v1587 = vunpack.c.l.b16 %v1482
        %v1588 = vunpack.c.h.b16 %v1482
        %v1589 = vpack.c.b16 %v1529, %v1525
        %v1590 = vpack.c.b16 %v1530, %v1526
        %v1591 = vpack.c.b16 %v1531, %v1527
        %v1592 = vpack.c.b16 %v1532, %v1528
        %v1593 = vpack.c.b16 %v1537, %v1533
        %v1594 = vpack.c.b16 %v1538, %v1534
        %v1595 = vpack.c.b16 %v1539, %v1535
        %v1596 = vpack.c.b16 %v1540, %v1536
        %v1597 = vpack.c.b16 %v1545, %v1541
        %v1598 = vpack.c.b16 %v1546, %v1542
        %v1599 = vpack.c.b16 %v1547, %v1543
        %v1600 = vpack.c.b16 %v1548, %v1544
        %v1601 = vpack.c.b16 %v1553, %v1549
        %v1602 = vpack.c.b16 %v1554, %v1550
        %v1603 = vpack.c.b16 %v1555, %v1551
        %v1604 = vpack.c.b16 %v1556, %v1552
        %v1605 = vpack.c.b16 %v1561, %v1557
        %v1606 = vpack.c.b16 %v1562, %v1558
        %v1607 = vpack.c.b16 %v1563, %v1559
        %v1608 = vpack.c.b16 %v1564, %v1560
        %v1609 = vpack.c.b16 %v1569, %v1565
        %v1610 = vpack.c.b16 %v1570, %v1566
        %v1611 = vpack.c.b16 %v1571, %v1567
        %v1612 = vpack.c.b16 %v1572, %v1568
        %v1613 = vpack.c.b16 %v1577, %v1573
        %v1614 = vpack.c.b16 %v1578, %v1574
        %v1615 = vpack.c.b16 %v1579, %v1575
        %v1616 = vpack.c.b16 %v1580, %v1576
        %v1617 = vpack.c.b16 %v1585, %v1581
        %v1618 = vpack.c.b16 %v1586, %v1582
        %v1619 = vpack.c.b16 %v1587, %v1583
        %v1620 = vpack.c.b16 %v1588, %v1584
        %1653 = vmatpush.bf16.msra.mxu0 %v1617
        %1654 = vmatpush.bf16.msra.mxu0 %v1613
        %1655 = vmatpush.bf16.msra.mxu0 %v1609
        %1656 = vmatpush.bf16.msra.mxu0 %v1605
        %1657 = vmatpush.bf16.msra.mxu0 %v1601
        %1658 = vmatpush.bf16.msra.mxu0 %v1597
        %1659 = vmatpush.bf16.msra.mxu0 %v1593
        %1660 = vmatpush.bf16.msra.mxu0 %v1589
        %1661 = vmatmul.bf16.gmra.mxu0 %v1450
        %v1662 = vpop.f32.mrf.mxu0
        %v1663 = vadd.f32 %v1485, %v1662
        %v1664 = vpop.f32.mrf.mxu0
        %1665 = vdwg.mxu0
        %1666 = vmatpush.bf16.msra.mxu0 %v1618
        %1667 = vmatpush.bf16.msra.mxu0 %v1614
        %1668 = vmatpush.bf16.msra.mxu0 %v1610
        %1669 = vmatpush.bf16.msra.mxu0 %v1606
        %1670 = vmatpush.bf16.msra.mxu0 %v1602
        %1671 = vmatpush.bf16.msra.mxu0 %v1598
        %1672 = vmatpush.bf16.msra.mxu0 %v1594
        %1673 = vmatpush.bf16.msra.mxu0 %v1590
        %1674 = vmatmul.bf16.gmra.mxu0 %v1450
        %v1675 = vpop.f32.mrf.mxu0
        %v1676 = vadd.f32 %v1486, %v1675
        %v1677 = vpop.f32.mrf.mxu0
        %1678 = vdwg.mxu0
        %1679 = vmatpush.bf16.msra.mxu0 %v1619
        %1680 = vmatpush.bf16.msra.mxu0 %v1615
        %1681 = vmatpush.bf16.msra.mxu0 %v1611
        %1682 = vmatpush.bf16.msra.mxu0 %v1607
        %1683 = vmatpush.bf16.msra.mxu0 %v1603
        %1684 = vmatpush.bf16.msra.mxu0 %v1599
        %1685 = vmatpush.bf16.msra.mxu0 %v1595
        %1686 = vmatpush.bf16.msra.mxu0 %v1591
        %1687 = vmatmul.bf16.gmra.mxu0 %v1450
        %v1688 = vpop.f32.mrf.mxu0
        %v1689 = vadd.f32 %v1487, %v1688
        %v1690 = vpop.f32.mrf.mxu0
        %1691 = vdwg.mxu0
        %1692 = vmatpush.bf16.msra.mxu0 %v1620
        %1693 = vmatpush.bf16.msra.mxu0 %v1616
        %1694 = vmatpush.bf16.msra.mxu0 %v1612
        %1695 = vmatpush.bf16.msra.mxu0 %v1608
        %1696 = vmatpush.bf16.msra.mxu0 %v1604
        %1697 = vmatpush.bf16.msra.mxu0 %v1600
        %1698 = vmatpush.bf16.msra.mxu0 %v1596
        %1699 = vmatpush.bf16.msra.mxu0 %v1592
        %1700 = vmatmul.bf16.gmra.mxu0 %v1450
        %v1701 = vpop.f32.mrf.mxu0
        %v1702 = vadd.f32 %v1488, %v1701
        %v1703 = vpop.f32.mrf.mxu0
        %1704 = vdwg.mxu0
        %v1705 = vmax.f32 %v1663, 0.0
        %v1706 = vmax.f32 %v1676, 0.0
        %v1707 = vmax.f32 %v1689, 0.0
        %v1708 = vmax.f32 %v1702, 0.0
        %v1709 = vpack.c.bf16 %v1705, %v1705
        %v1710 = vpack.c.bf16 %v1706, %v1706
        %v1711 = vpack.c.bf16 %v1707, %v1707
        %v1712 = vpack.c.bf16 %v1708, %v1708
        %v1713 = vld [vmem:[%s678] sm:$0xf]
        %v1714 = vld [vmem:[%s678 + $0x4] sm:$0xf]
        %v1715 = vld [vmem:[%s678 + $0x8] sm:$0xf]
        %v1716 = vld [vmem:[%s678 + $0xc] sm:$0xf]
        %v1717 = vld [vmem:[%s678 + $0x10] sm:$0xf]
        %v1718 = vld [vmem:[%s678 + $0x14] sm:$0xf]
        %v1719 = vld [vmem:[%s678 + $0x18] sm:$0xf]
        %v1720 = vld [vmem:[%s678 + $0x1c] sm:$0xf]
        %v1721 = vld [vmem:[%s678 + $0x20] sm:$0xf]
        %v1722 = vld [vmem:[%s678 + $0x24] sm:$0xf]
        %v1723 = vld [vmem:[%s678 + $0x28] sm:$0xf]
        %v1724 = vld [vmem:[%s678 + $0x2c] sm:$0xf]
        %v1725 = vld [vmem:[%s678 + $0x30] sm:$0xf]
        %v1726 = vld [vmem:[%s678 + $0x34] sm:$0xf]
        %v1727 = vld [vmem:[%s678 + $0x38] sm:$0xf]
        %v1728 = vld [vmem:[%s678 + $0x3c] sm:$0xf]
        %v1729 = vld [vmem:[%s678 + $0x40] sm:$0xf]
        %v1730 = vld [vmem:[%s678 + $0x44] sm:$0xf]
        %v1731 = vld [vmem:[%s678 + $0x48] sm:$0xf]
        %v1732 = vld [vmem:[%s678 + $0x4c] sm:$0xf]
        %v1733 = vld [vmem:[%s678 + $0x50] sm:$0xf]
        %v1734 = vld [vmem:[%s678 + $0x54] sm:$0xf]
        %v1735 = vld [vmem:[%s678 + $0x58] sm:$0xf]
        %v1736 = vld [vmem:[%s678 + $0x5c] sm:$0xf]
        %v1737 = vld [vmem:[%s678 + $0x60] sm:$0xf]
        %v1738 = vld [vmem:[%s678 + $0x64] sm:$0xf]
        %v1739 = vld [vmem:[%s678 + $0x68] sm:$0xf]
        %v1740 = vld [vmem:[%s678 + $0x6c] sm:$0xf]
        %v1741 = vld [vmem:[%s678 + $0x70] sm:$0xf]
        %v1742 = vld [vmem:[%s678 + $0x74] sm:$0xf]
        %v1743 = vld [vmem:[%s678 + $0x78] sm:$0xf]
        %v1744 = vld [vmem:[%s678 + $0x7c] sm:$0xf]
        %v1745 = vld [vmem:[%s678 + $0x80] sm:$0xf]
        %v1746 = vld [vmem:[%s678 + $0x84] sm:$0xf]
        %v1747 = vld [vmem:[%s678 + $0x88] sm:$0xf]
        %v1748 = vld [vmem:[%s678 + $0x8c] sm:$0xf]
        %v1749 = vld [vmem:[%s678 + $0x90] sm:$0xf]
        %v1750 = vld [vmem:[%s678 + $0x94] sm:$0xf]
        %v1751 = vld [vmem:[%s678 + $0x98] sm:$0xf]
        %v1752 = vld [vmem:[%s678 + $0x9c] sm:$0xf]
        %v1753 = vld [vmem:[%s678 + $0xa0] sm:$0xf]
        %v1754 = vld [vmem:[%s678 + $0xa4] sm:$0xf]
        %v1755 = vld [vmem:[%s678 + $0xa8] sm:$0xf]
        %v1756 = vld [vmem:[%s678 + $0xac] sm:$0xf]
        %v1757 = vld [vmem:[%s678 + $0xb0] sm:$0xf]
        %v1758 = vld [vmem:[%s678 + $0xb4] sm:$0xf]
        %v1759 = vld [vmem:[%s678 + $0xb8] sm:$0xf]
        %v1760 = vld [vmem:[%s678 + $0xbc] sm:$0xf]
        %v1761 = vld [vmem:[%s678 + $0xc0] sm:$0xf]
        %v1762 = vld [vmem:[%s678 + $0xc4] sm:$0xf]
        %v1763 = vld [vmem:[%s678 + $0xc8] sm:$0xf]
        %v1764 = vld [vmem:[%s678 + $0xcc] sm:$0xf]
        %v1765 = vld [vmem:[%s678 + $0xd0] sm:$0xf]
        %v1766 = vld [vmem:[%s678 + $0xd4] sm:$0xf]
        %v1767 = vld [vmem:[%s678 + $0xd8] sm:$0xf]
        %v1768 = vld [vmem:[%s678 + $0xdc] sm:$0xf]
        %v1769 = vld [vmem:[%s678 + $0xe0] sm:$0xf]
        %v1770 = vld [vmem:[%s678 + $0xe4] sm:$0xf]
        %v1771 = vld [vmem:[%s678 + $0xe8] sm:$0xf]
        %v1772 = vld [vmem:[%s678 + $0xec] sm:$0xf]
        %v1773 = vld [vmem:[%s678 + $0xf0] sm:$0xf]
        %v1774 = vld [vmem:[%s678 + $0xf4] sm:$0xf]
        %v1775 = vld [vmem:[%s678 + $0xf8] sm:$0xf]
        %v1776 = vld [vmem:[%s678 + $0xfc] sm:$0xf]
        %v1777 = vld [vmem:[%s794] sm:$0x1]
        %v1779 = vperm.slane %v1777, 0
        %v1845 = vunpack.c.l.b16 %v1713
        %v1846 = vunpack.c.l.b16 %v1714
        %v1847 = vunpack.c.l.b16 %v1715
        %v1848 = vunpack.c.l.b16 %v1716
        %v1849 = vunpack.c.l.b16 %v1717
        %v1850 = vunpack.c.l.b16 %v1718
        %v1851 = vunpack.c.l.b16 %v1719
        %v1852 = vunpack.c.l.b16 %v1720
        %v1853 = vunpack.c.l.b16 %v1721
        %v1854 = vunpack.c.l.b16 %v1722
        %v1855 = vunpack.c.l.b16 %v1723
        %v1856 = vunpack.c.l.b16 %v1724
        %v1857 = vunpack.c.l.b16 %v1725
        %v1858 = vunpack.c.l.b16 %v1726
        %v1859 = vunpack.c.l.b16 %v1727
        %v1860 = vunpack.c.l.b16 %v1728
        %v1861 = vunpack.c.l.b16 %v1729
        %v1862 = vunpack.c.l.b16 %v1730
        %v1863 = vunpack.c.l.b16 %v1731
        %v1864 = vunpack.c.l.b16 %v1732
        %v1865 = vunpack.c.l.b16 %v1733
        %v1866 = vunpack.c.l.b16 %v1734
        %v1867 = vunpack.c.l.b16 %v1735
        %v1868 = vunpack.c.l.b16 %v1736
        %v1869 = vunpack.c.l.b16 %v1737
        %v1870 = vunpack.c.l.b16 %v1738
        %v1871 = vunpack.c.l.b16 %v1739
        %v1872 = vunpack.c.l.b16 %v1740
        %v1873 = vunpack.c.l.b16 %v1741
        %v1874 = vunpack.c.l.b16 %v1742
        %v1875 = vunpack.c.l.b16 %v1743
        %v1876 = vunpack.c.l.b16 %v1744
        %v1877 = vunpack.c.l.b16 %v1745
        %v1878 = vunpack.c.l.b16 %v1746
        %v1879 = vunpack.c.l.b16 %v1747
        %v1880 = vunpack.c.l.b16 %v1748
        %v1881 = vunpack.c.l.b16 %v1749
        %v1882 = vunpack.c.l.b16 %v1750
        %v1883 = vunpack.c.l.b16 %v1751
        %v1884 = vunpack.c.l.b16 %v1752
        %v1885 = vunpack.c.l.b16 %v1753
        %v1886 = vunpack.c.l.b16 %v1754
        %v1887 = vunpack.c.l.b16 %v1755
        %v1888 = vunpack.c.l.b16 %v1756
        %v1889 = vunpack.c.l.b16 %v1757
        %v1890 = vunpack.c.l.b16 %v1758
        %v1891 = vunpack.c.l.b16 %v1759
        %v1892 = vunpack.c.l.b16 %v1760
        %v1893 = vunpack.c.l.b16 %v1761
        %v1894 = vunpack.c.l.b16 %v1762
        %v1895 = vunpack.c.l.b16 %v1763
        %v1896 = vunpack.c.l.b16 %v1764
        %v1897 = vunpack.c.l.b16 %v1765
        %v1898 = vunpack.c.l.b16 %v1766
        %v1899 = vunpack.c.l.b16 %v1767
        %v1900 = vunpack.c.l.b16 %v1768
        %v1901 = vunpack.c.l.b16 %v1769
        %v1902 = vunpack.c.l.b16 %v1770
        %v1903 = vunpack.c.l.b16 %v1771
        %v1904 = vunpack.c.l.b16 %v1772
        %v1905 = vunpack.c.l.b16 %v1773
        %v1906 = vunpack.c.l.b16 %v1774
        %v1907 = vunpack.c.l.b16 %v1775
        %v1908 = vunpack.c.l.b16 %v1776
        %v1909 = vpack.c.b16 %v1846, %v1845
        %v1910 = vpack.c.b16 %v1848, %v1847
        %v1911 = vpack.c.b16 %v1850, %v1849
        %v1912 = vpack.c.b16 %v1852, %v1851
        %v1913 = vpack.c.b16 %v1854, %v1853
        %v1914 = vpack.c.b16 %v1856, %v1855
        %v1915 = vpack.c.b16 %v1858, %v1857
        %v1916 = vpack.c.b16 %v1860, %v1859
        %v1917 = vpack.c.b16 %v1862, %v1861
        %v1918 = vpack.c.b16 %v1864, %v1863
        %v1919 = vpack.c.b16 %v1866, %v1865
        %v1920 = vpack.c.b16 %v1868, %v1867
        %v1921 = vpack.c.b16 %v1870, %v1869
        %v1922 = vpack.c.b16 %v1872, %v1871
        %v1923 = vpack.c.b16 %v1874, %v1873
        %v1924 = vpack.c.b16 %v1876, %v1875
        %v1925 = vpack.c.b16 %v1878, %v1877
        %v1926 = vpack.c.b16 %v1880, %v1879
        %v1927 = vpack.c.b16 %v1882, %v1881
        %v1928 = vpack.c.b16 %v1884, %v1883
        %v1929 = vpack.c.b16 %v1886, %v1885
        %v1930 = vpack.c.b16 %v1888, %v1887
        %v1931 = vpack.c.b16 %v1890, %v1889
        %v1932 = vpack.c.b16 %v1892, %v1891
        %v1933 = vpack.c.b16 %v1894, %v1893
        %v1934 = vpack.c.b16 %v1896, %v1895
        %v1935 = vpack.c.b16 %v1898, %v1897
        %v1936 = vpack.c.b16 %v1900, %v1899
        %v1937 = vpack.c.b16 %v1902, %v1901
        %v1938 = vpack.c.b16 %v1904, %v1903
        %v1939 = vpack.c.b16 %v1906, %v1905
        %v1940 = vpack.c.b16 %v1908, %v1907
        %1973 = vmatpush.bf16.msra.mxu0 %v1916
        %1974 = vmatpush.bf16.msra.mxu0 %v1915
        %1975 = vmatpush.bf16.msra.mxu0 %v1914
        %1976 = vmatpush.bf16.msra.mxu0 %v1913
        %1977 = vmatpush.bf16.msra.mxu0 %v1912
        %1978 = vmatpush.bf16.msra.mxu0 %v1911
        %1979 = vmatpush.bf16.msra.mxu0 %v1910
        %1980 = vmatpush.bf16.msra.mxu0 %v1909
        %1981 = vmatmul.bf16.gmra.mxu0 %v1709
        %v1982 = vpop.f32.mrf.mxu0
        %v1983 = vadd.f32 %v1779, %v1982
        %v1984 = vpop.f32.mrf.mxu0
        %1985 = vdwg.mxu0
        %1986 = vmatpush.bf16.msra.mxu0 %v1924
        %1987 = vmatpush.bf16.msra.mxu0 %v1923
        %1988 = vmatpush.bf16.msra.mxu0 %v1922
        %1989 = vmatpush.bf16.msra.mxu0 %v1921
        %1990 = vmatpush.bf16.msra.mxu0 %v1920
        %1991 = vmatpush.bf16.msra.mxu0 %v1919
        %1992 = vmatpush.bf16.msra.mxu0 %v1918
        %1993 = vmatpush.bf16.msra.mxu0 %v1917
        %1994 = vmatmul.bf16.gmra.mxu0 %v1710
        %v1995 = vpop.f32.mrf.mxu0
        %v1996 = vadd.f32 %v1983, %v1995
        %v1997 = vpop.f32.mrf.mxu0
        %1998 = vdwg.mxu0
        %1999 = vmatpush.bf16.msra.mxu0 %v1932
        %2000 = vmatpush.bf16.msra.mxu0 %v1931
        %2001 = vmatpush.bf16.msra.mxu0 %v1930
        %2002 = vmatpush.bf16.msra.mxu0 %v1929
        %2003 = vmatpush.bf16.msra.mxu0 %v1928
        %2004 = vmatpush.bf16.msra.mxu0 %v1927
        %2005 = vmatpush.bf16.msra.mxu0 %v1926
        %2006 = vmatpush.bf16.msra.mxu0 %v1925
        %2007 = vmatmul.bf16.gmra.mxu0 %v1711
        %v2008 = vpop.f32.mrf.mxu0
        %v2009 = vadd.f32 %v1996, %v2008
        %v2010 = vpop.f32.mrf.mxu0
        %2011 = vdwg.mxu0
        %2012 = vmatpush.bf16.msra.mxu0 %v1940
        %2013 = vmatpush.bf16.msra.mxu0 %v1939
        %2014 = vmatpush.bf16.msra.mxu0 %v1938
        %2015 = vmatpush.bf16.msra.mxu0 %v1937
        %2016 = vmatpush.bf16.msra.mxu0 %v1936
        %2017 = vmatpush.bf16.msra.mxu0 %v1935
        %2018 = vmatpush.bf16.msra.mxu0 %v1934
        %2019 = vmatpush.bf16.msra.mxu0 %v1933
        %2020 = vmatmul.bf16.gmra.mxu0 %v1712
        %v2021 = vpop.f32.mrf.mxu0
        %v2022 = vadd.f32 %v2009, %v2021
        %v2023 = vpop.f32.mrf.mxu0
        %2024 = vdwg.mxu0
        %v2025 = vadd.f32 %v1419, %v2022
        %2026 = vst [vmem:[#allocation2] sm:$0xff] %v2025
        %p2027 = scmp.eq.s32.totalorder %s44, 5
        // Predicated region
        $region105: #{gpt_forward.1} parent=83 // pred_check
          %p2028 = pneg %p2027
        $region106: #{gpt_forward.1} parent=83 // pred_check_branch
          %2030 = sbr.rel (%p2028) target = $region108
        $region107: #{gpt_forward.1} parent=83 // pred_region
          %v2031 = vld [vmem:[%s12] sm:$0x1]
          %v2032 = vld [vmem:[%s13] sm:$0x1]
          %2033 = vadd.xlane.f32.xlu0 %v2025
          %v2034 = vpop.xlane.xlu0 %2033
          %v2035 = vmul.f32 %v2034, %v813
          %v2036 = vsub.f32 %v2025, %v2035
          %v2037 = vmul.f32 %v2036, %v2036
          %2038 = vadd.xlane.f32.xlu0 %v2037
          %v2039 = vpop.xlane.xlu0 %2038
          %v2040 = vmul.f32 %v2039, %v813
          %v2041 = vadd.f32 %v2040, 1e-05
          %v2042 = vrsqrt.pop %v2041
          %v2043 = vmul.f32 %v2042, %v2041
          %v2044 = vmul.f32 %v2043, %v2042
          %v2045 = vmul.f32 0.5, %v2044
          %v2046 = vsub.f32 1.5, %v2045
          %v2047 = vmul.f32 %v2042, %v2046
          %vm2048 = vweird.f32 %v2041
          %vm2049 = vweird.f32 %v2042
          %vm2050 = vmor %vm2048, %vm2049
          %v2051 = vsel %vm2050, %v2042, %v2047
          %v2052 = vmul.f32 %v2036, %v2051
          %v2054 = vperm.slane %v2031, 0
          %v2056 = vmul.f32 %v2052, %v2054
          %v2058 = vperm.slane %v2032, 0
          %v2060 = vadd.f32 %v2056, %v2058
          %v2061 = vpack.c.bf16 %v2060, %v2060
          %v2062 = vld [vmem:[%s14] sm:$0xf]
          %v2063 = vld [vmem:[%s14 + $0x4] sm:$0xf]
          %v2064 = vld [vmem:[%s14 + $0x8] sm:$0xf]
          %v2065 = vld [vmem:[%s14 + $0xc] sm:$0xf]
          %v2066 = vld [vmem:[%s14 + $0x10] sm:$0xf]
          %v2067 = vld [vmem:[%s14 + $0x14] sm:$0xf]
          %v2068 = vld [vmem:[%s14 + $0x18] sm:$0xf]
          %v2069 = vld [vmem:[%s14 + $0x1c] sm:$0xf]
          %v2070 = vld [vmem:[%s14 + $0x20] sm:$0xf]
          %v2071 = vld [vmem:[%s14 + $0x24] sm:$0xf]
          %v2072 = vld [vmem:[%s14 + $0x28] sm:$0xf]
          %v2073 = vld [vmem:[%s14 + $0x2c] sm:$0xf]
          %v2074 = vld [vmem:[%s14 + $0x30] sm:$0xf]
          %v2075 = vld [vmem:[%s14 + $0x34] sm:$0xf]
          %v2076 = vld [vmem:[%s14 + $0x38] sm:$0xf]
          %v2077 = vld [vmem:[%s14 + $0x3c] sm:$0xf]
          %v2078 = vld [vmem:[%s15] sm:$0x1]
          %v2080 = vperm.slane %v2078, 0
          %v2098 = vunpack.c.l.b16 %v2062
          %v2099 = vunpack.c.l.b16 %v2063
          %v2100 = vunpack.c.l.b16 %v2064
          %v2101 = vunpack.c.l.b16 %v2065
          %v2102 = vunpack.c.l.b16 %v2066
          %v2103 = vunpack.c.l.b16 %v2067
          %v2104 = vunpack.c.l.b16 %v2068
          %v2105 = vunpack.c.l.b16 %v2069
          %v2106 = vunpack.c.l.b16 %v2070
          %v2107 = vunpack.c.l.b16 %v2071
          %v2108 = vunpack.c.l.b16 %v2072
          %v2109 = vunpack.c.l.b16 %v2073
          %v2110 = vunpack.c.l.b16 %v2074
          %v2111 = vunpack.c.l.b16 %v2075
          %v2112 = vunpack.c.l.b16 %v2076
          %v2113 = vunpack.c.l.b16 %v2077
          %v2114 = vpack.c.b16 %v2099, %v2098
          %v2115 = vpack.c.b16 %v2101, %v2100
          %v2116 = vpack.c.b16 %v2103, %v2102
          %v2117 = vpack.c.b16 %v2105, %v2104
          %v2118 = vpack.c.b16 %v2107, %v2106
          %v2119 = vpack.c.b16 %v2109, %v2108
          %v2120 = vpack.c.b16 %v2111, %v2110
          %v2121 = vpack.c.b16 %v2113, %v2112
          %2130 = vmatpush.bf16.msra.mxu0 %v2121
          %2131 = vmatpush.bf16.msra.mxu0 %v2120
          %2132 = vmatpush.bf16.msra.mxu0 %v2119
          %2133 = vmatpush.bf16.msra.mxu0 %v2118
          %2134 = vmatpush.bf16.msra.mxu0 %v2117
          %2135 = vmatpush.bf16.msra.mxu0 %v2116
          %2136 = vmatpush.bf16.msra.mxu0 %v2115
          %2137 = vmatpush.bf16.msra.mxu0 %v2114
          %2138 = vmatmul.bf16.gmra.mxu0 %v2061
          %v2139 = vpop.f32.mrf.mxu0
          %v2140 = vadd.f32 %v2080, %v2139
          %v2141 = vpop.f32.mrf.mxu0
          %2142 = vdwg.mxu0
          %2143 = vst [vmem:[%s768] sm:$0xff] %v2140
        $region108: #{gpt_forward.1} parent=83 // pred_fallthru
          _
        %s2144 = sand.u32 %s455, 1
        %s2145 = scalar_lea.sflag [#allocation5], %s2144
        %s2146 = sand.u32 %s455, 1
        %s2147 = smul.addr %s2146, 8
        %s2148 = scalar_lea.vmem [#allocation11], %s2147
        // Predicated region
        $region109: #{gpt_forward.1} parent=83 // pred_check
          %p2149 = pneg %p465
        $region110: #{gpt_forward.1} parent=83 // pred_check_branch
          %2151 = sbr.rel (%p2149) target = $region112
        $region111: #{gpt_forward.1} parent=83 // pred_region
          %2153 = vsyncadd %s2145, 0
          %s2154 = smul.addr %s43, 8
          %s2155 = scalar_lea.hbm %s16, %s2154
          %s2157 = sshll.u32 %s2148, 4
          %s2158 = int_to_ptr.vmem [resolvable:$true] %s2157
          %s2159 = sshll.u32 %s2155, 4
          %s2160 = int_to_ptr.hbm [resolvable:$true] %s2159
          %2162 = dma.vmem_to_hbm [thread:$0]  %s2158, 128, %s2160, %s2145
        $region112: #{gpt_forward.1} parent=83 // pred_fallthru
          _
      $region84: #{gpt_forward.1} parent=5 // pred_fallthru
        _
      %p2163 = scmp.le.s32.totalorder 2, %s34
      // Predicated region
      $region113: #{gpt_forward.1} parent=5 // pred_check
        %p2164 = pneg %p2163
      $region114: #{gpt_forward.1} parent=5 // pred_check_branch
        %2166 = sbr.rel (%p2164) target = $region116
      $region115: #{gpt_forward.1} parent=5 // pred_region
        %s2167 = ssub.s32 %s34, 2
        // Predicated region
        $region117: #{gpt_forward.1} parent=115 // pred_check
          %p2168 = pneg %p471
        $region118: #{gpt_forward.1} parent=115 // pred_check_branch
          %2170 = sbr.rel (%p2168) target = $region120
        $region119: #{gpt_forward.1} parent=115 // pred_region
          %s2171 = sand.u32 %s456, 1
          %s2172 = scalar_lea.sflag [#allocation5], %s2171
          %s2173 = sand.u32 %s456, 1
          %s2174 = smul.addr %s2173, 8
          %s2175 = scalar_lea.vmem [#allocation11], %s2174
          %2177 = dma.done %s2172, 128
        $region120: #{gpt_forward.1} parent=115 // pred_fallthru
          _
      $region116: #{gpt_forward.1} parent=5 // pred_fallthru
        _
    $region6: #{gpt_forward.1} parent=1 // loop_footer
      %s38 = sadd.s32 1, %s34
    $region7: #{gpt_forward.1} parent=1 // loop_footer_branch
      %33 = sbr.rel target = $region3
    $region8: #{gpt_forward.1} parent=1 // loop_exit
      _
    %2178 = vsyncpa [#allocation4], 1
    %s2179 = scalar_lea.sflag [#allocation4], 1
    %2180 = vsyncpa %s2179, 1
    %2181 = vsyncpa [#allocation7], 1
    %s2182 = scalar_lea.sflag [#allocation7], 1
    %2183 = vsyncpa %s2182, 1
    %2184 = vsyncpa [#allocation10], 1
    %s2185 = scalar_lea.sflag [#allocation10], 1
    %2186 = vsyncpa %s2185, 1
    %2187 = vsyncpa [#allocation5], 1
    %s2188 = scalar_lea.sflag [#allocation5], 1
    %2189 = vsyncpa %s2188, 1

</llo_original>
